<compile_context>
chip_gen: v7x
topology: tpu7x:2x2x1
jax: 0.10.0
libtpu: 0.0.40
codegen_flags: <defaults>
</compile_context>

<pallas_src>
import functools

import jax
import jax.numpy as jnp
from jax import lax
from jax.experimental import pallas as pl
from jax.experimental.pallas import tpu as pltpu


def _round_up(x, m):
    return (x + m - 1) // m * m


def _dy_intra_kernel(v_ref, t_ref, w_t4v_ref, w_kqv_ref, w_out_ref, bias_ref,
                     out_ref, k_scr, q_scr, vv_scr, upd_scr,
                     *, num_head, seq_len):
    """One grid step = one (batch, query_tile). Heads are unrolled statically.

    bias_ref rows: 0=b_t4v, 1=b_k, 2=b_q*scale, 3=b_v, 4=b_out (rows 5..7 zero pad).
    The 1/sqrt(d) softmax scale is pre-folded into the q third of w_kqv / bias row 2.
    """
    qi = pl.program_id(1)
    n_pad, O = k_scr.shape
    d = O // num_head
    tq = out_ref.shape[1]
    mxu = v_ref.dtype

    # ---- once per batch: full-width, lane-dense projections into VMEM scratch ----
    @pl.when(qi == 0)
    def _project():
        v_full = v_ref[0]                                    # [n_pad, v_size]
        t_full = t_ref[0]                                    # [n_pad, t_size]
        gate = jax.nn.sigmoid(
            jnp.dot(jnp.maximum(t_full, 0), w_t4v_ref[...],
                    preferred_element_type=jnp.float32) + bias_ref[0:1, :])   # [n_pad,O] f32
        kqv = jnp.dot(jnp.maximum(v_full, 0), w_kqv_ref[...],
                      preferred_element_type=jnp.float32)    # [n_pad, 3*O] f32
        g1 = 1.0 + gate
        k_scr[...] = (g1 * (kqv[:, :O] + bias_ref[1:2, :])).astype(mxu)
        q_scr[...] = (g1 * (kqv[:, O:2 * O] + bias_ref[2:3, :])).astype(mxu)  # scale folded
        vv_scr[...] = (kqv[:, 2 * O:] + bias_ref[3:4, :]).astype(mxu)

    # ---- attention for this query tile, one head at a time ----
    row0 = pl.multiple_of(qi * tq, tq)
    q_tile = q_scr[pl.ds(row0, tq), :]                        # [tq, O]

    for h in range(num_head):                                 # static unroll
        lo = h * d
        qh = q_tile[:, lo:lo + d]                             # [tq, d]
        kh = k_scr[:, lo:lo + d]                              # [n_pad, d]
        vh = vv_scr[:, lo:lo + d]                             # [n_pad, d]
        scores = lax.dot_general(qh, kh,
                                 dimension_numbers=(((1,), (1,)), ((), ())),
                                 preferred_element_type=jnp.float32)   # [tq, n_pad]
        if seq_len != n_pad:  # static branch: mask padded key columns
            col = lax.broadcasted_iota(jnp.int32, scores.shape, 1)
            scores = jnp.where(col < seq_len, scores, -1e30)
        scores = scores - jnp.max(scores, axis=-1, keepdims=True)
        p = jnp.exp(scores)
        denom = jnp.sum(p, axis=-1, keepdims=True)            # [tq, 1] f32
        pv = jnp.dot(p.astype(mxu), vh,
                     preferred_element_type=jnp.float32)      # [tq, d]  f32
        # softmax denominator applied post-PV (approx reciprocal runs on the EUP)
        upd_scr[:, lo:lo + d] = pv * pl.reciprocal(denom, approx=True)

    # ---- single full-width output projection: (v + update) @ W_out + b_out ----
    resid = v_ref[0, pl.ds(row0, tq), :].astype(jnp.float32) + upd_scr[...]
    out_ref[0] = (jnp.dot(resid.astype(mxu), w_out_ref[...],
                          preferred_element_type=jnp.float32)
                  + bias_ref[4:5, :]).astype(out_ref.dtype)


def _pick_vmem_limit():
    """Raise the scoped VMEM limit, bounded by the chip's physical VMEM capacity.

    Advisory only: failure to query the chip just leaves the compiler default.
    """
    try:
        cap = int(pltpu.get_tpu_info().vmem_capacity_bytes)
    except Exception:  # noqa: BLE001 - advisory-only limit, safe to fall back
        return None
    return int(min(cap * 7 // 8, 120 * 2 ** 20))


def dy_intra_modality_update(v, t, params, *, num_head,
                             compute_dtype=jnp.bfloat16,
                             out_dtype=jnp.float32,
                             max_q_tile=512):
    """v: [B, N, v_size], t: [B, N, t_size] -> [B, N, output_size]."""
    B, N, v_size = v.shape
    _, _, t_size = t.shape
    w_t4v, b_t4v, w_v, b_v, w_out, b_out = params
    O = w_t4v.shape[1]
    assert O % num_head == 0, "output_size must be divisible by num_head"
    assert v_size == O, "residual (v + v_update) requires v_size == output_size"
    d = O // num_head
    scale = float(d) ** -0.5
    f32 = jnp.float32
    mxu_dtype = jnp.dtype(compute_dtype)

    # ---- query tiling (flash-style: scores stay [Tq, N]) ----
    if N <= 2 * max_q_tile:
        n_pad = _round_up(N, 8)
        tq = n_pad
    else:
        tq = max_q_tile
        n_pad = _round_up(N, tq)
    qt = n_pad // tq

    # ---- one-time parameter packing (outside the kernel, plain XLA ops) ----
    # 1/sqrt(d) is folded into the q third of the packed k/q/v weights and its bias.
    w_kqv = jnp.concatenate(
        [w_v[:, :O], w_v[:, O:2 * O] * scale, w_v[:, 2 * O:]], axis=1).astype(mxu_dtype)
    w_t4v_c = w_t4v.astype(mxu_dtype)
    w_out_c = w_out.astype(mxu_dtype)
    zero_row = jnp.zeros((1, O), f32)
    bias_pack = jnp.concatenate(
        [b_t4v.astype(f32),
         b_v[:, :O].astype(f32),
         (b_v[:, O:2 * O] * scale).astype(f32),
         b_v[:, 2 * O:].astype(f32),
         b_out.astype(f32),
         zero_row, zero_row, zero_row], axis=0)               # [8, O]

    v_in = v.astype(mxu_dtype)
    t_in = t.astype(mxu_dtype)
    if n_pad != N:
        pad = ((0, 0), (0, n_pad - N), (0, 0))
        v_in = jnp.pad(v_in, pad)
        t_in = jnp.pad(t_in, pad)

    operands = (v_in, t_in, w_t4v_c, w_kqv, w_out_c, bias_pack)
    kernel = functools.partial(_dy_intra_kernel, num_head=num_head, seq_len=N)

    # Advisory cost estimate (helps XLA schedule the surrounding graph).
    flops = int(2 * B * n_pad * (t_size * O + v_size * 3 * O)   # gate + k/q/v projections
                + 4 * B * n_pad * n_pad * O                     # QK^T + P@V over all heads
                + 2 * B * n_pad * O * O)                        # output projection
    transcendentals = int(B * n_pad * O                          # sigmoid
                          + B * num_head * n_pad * (n_pad + 1))  # exp + reciprocal
    bytes_accessed = int(sum(a.size * a.dtype.itemsize for a in operands)
                         + B * n_pad * O * jnp.dtype(out_dtype).itemsize)
    cost = pl.CostEstimate(flops=flops, transcendentals=transcendentals,
                           bytes_accessed=bytes_accessed)

    cp_kwargs = dict(dimension_semantics=("parallel", "arbitrary"))
    vmem_limit = _pick_vmem_limit()
    if vmem_limit is not None:
        cp_kwargs["vmem_limit_bytes"] = vmem_limit

    grid_spec = pltpu.PrefetchScalarGridSpec(
        num_scalar_prefetch=0,
        grid=(B, qt),
        in_specs=[
            # per-batch activations (block index constant across query tiles -> one DMA/batch)
            pl.BlockSpec((1, n_pad, v_size), lambda b, qi: (b, 0, 0)),
            pl.BlockSpec((1, n_pad, t_size), lambda b, qi: (b, 0, 0)),
            # weights & packed biases: constant index_map -> fetched once, VMEM-resident
            pl.BlockSpec((t_size, O), lambda b, qi: (0, 0)),
            pl.BlockSpec((v_size, 3 * O), lambda b, qi: (0, 0)),
            pl.BlockSpec((O, O), lambda b, qi: (0, 0)),
            pl.BlockSpec((8, O), lambda b, qi: (0, 0)),
        ],
        out_specs=pl.BlockSpec((1, tq, O), lambda b, qi: (b, qi, 0)),
        scratch_shapes=[
            pltpu.VMEM((n_pad, O), mxu_dtype),   # gated k
            pltpu.VMEM((n_pad, O), mxu_dtype),   # gated+scaled q
            pltpu.VMEM((n_pad, O), mxu_dtype),   # v_v
            pltpu.VMEM((tq, O), jnp.float32),    # per-tile attention update
        ],
    )

    out = pl.pallas_call(
        kernel,
        out_shape=jax.ShapeDtypeStruct((B, n_pad, O), out_dtype),
        grid_spec=grid_spec,
        compiler_params=pltpu.CompilerParams(**cp_kwargs),
        cost_estimate=cost,
    )(*operands)

    if n_pad != N:
        out = out[:, :N, :]
    return out


def _reference(v, t, params, num_head):
    """Pure-JAX reference mirroring the PyTorch forward (drop=0, t_lin unused)."""
    w_t4v, b_t4v, w_v, b_v, w_out, b_out = params
    O = w_t4v.shape[1]
    gate = jax.nn.sigmoid(jnp.maximum(t, 0.0) @ w_t4v + b_t4v[0])
    v_trans = jnp.maximum(v, 0.0) @ w_v + b_v[0]
    v_k, v_q, v_v = jnp.split(v_trans, 3, axis=-1)
    new_vq = (1.0 + gate) * v_q
    new_vk = (1.0 + gate) * v_k
    d = O // num_head
    outs = []
    for h in range(num_head):
        qh = new_vq[..., h * d:(h + 1) * d]
        kh = new_vk[..., h * d:(h + 1) * d]
        vh = v_v[..., h * d:(h + 1) * d]
        s = jnp.einsum('bqd,bkd->bqk', qh, kh) / (d ** 0.5)
        p = jax.nn.softmax(s, axis=-1)
        outs.append(jnp.einsum('bqk,bkd->bqd', p, vh))
    v_update = jnp.concatenate(outs, axis=-1)
    return (v + v_update) @ w_out + b_out[0]


if __name__ == "__main__":
    # Small shapes consistent with the module.
    B, N = 2, 8
    v_size = t_size = output_size = 32
    num_head = 4

    key = jax.random.PRNGKey(0)
    keys = jax.random.split(key, 8)

    v = jax.random.normal(keys[0], (B, N, v_size), dtype=jnp.float32)
    t = jax.random.normal(keys[1], (B, N, t_size), dtype=jnp.float32)

    # Deterministic parameter init (weights stored as [in, out]).
    s = 0.1
    w_t4v = s * jax.random.normal(keys[2], (t_size, output_size), jnp.float32)
    b_t4v = s * jax.random.normal(keys[3], (1, output_size), jnp.float32)
    w_v   = s * jax.random.normal(keys[4], (v_size, 3 * output_size), jnp.float32)
    b_v   = s * jax.random.normal(keys[5], (1, 3 * output_size), jnp.float32)
    w_out = s * jax.random.normal(keys[6], (output_size, output_size), jnp.float32)
    b_out = s * jax.random.normal(keys[7], (1, output_size), jnp.float32)
    params = (w_t4v, b_t4v, w_v, b_v, w_out, b_out)

    ref = _reference(v, t, params, num_head)

    # Full-precision MXU path (strict check; approx reciprocal in the softmax adds
    # ~1e-3 relative deviation vs. the exact softmax).
    out_f32 = jax.block_until_ready(
        dy_intra_modality_update(v, t, params, num_head=num_head,
                                 compute_dtype=jnp.float32, out_dtype=jnp.float32))
    assert out_f32.shape == (B, N, output_size)
    assert jnp.allclose(out_f32, ref, atol=5e-3, rtol=5e-3), "f32 path mismatch vs reference"

    # bf16 MXU path with bf16 output (performance configuration; looser tolerance).
    out_bf16 = jax.block_until_ready(
        dy_intra_modality_update(v, t, params, num_head=num_head,
                                 compute_dtype=jnp.bfloat16, out_dtype=jnp.bfloat16))
    assert out_bf16.shape == (B, N, output_size)
    assert jnp.allclose(out_bf16.astype(jnp.float32), ref, atol=7e-2, rtol=7e-2), \
        "bf16 path mismatch vs reference"

    # Ragged length (N not a multiple of 8): exercises the padded-key masking path.
    N2 = 12
    v2 = jax.random.normal(keys[0], (B, N2, v_size), jnp.float32)
    t2 = jax.random.normal(keys[1], (B, N2, t_size), jnp.float32)
    ref2 = _reference(v2, t2, params, num_head)
    out2 = jax.block_until_ready(
        dy_intra_modality_update(v2, t2, params, num_head=num_head,
                                 compute_dtype=jnp.float32, out_dtype=jnp.float32))
    assert out2.shape == (B, N2, output_size)
    assert jnp.allclose(out2, ref2, atol=5e-3, rtol=5e-3), "ragged path mismatch vs reference"

    print("KERNEL_OK")
</pallas_src>

<mosaic_0001>
module attributes {stable_mosaic.version = 11 : i64} {
  func.func @_dy_intra_kernel(%arg0: i32, %arg1: i32, %arg2: memref<1x8x32xf32, #tpu.memory_space<vmem>>, %arg3: memref<1x8x32xf32, #tpu.memory_space<vmem>>, %arg4: memref<32x32xf32, #tpu.memory_space<vmem>>, %arg5: memref<32x96xf32, #tpu.memory_space<vmem>>, %arg6: memref<32x32xf32, #tpu.memory_space<vmem>>, %arg7: memref<8x32xf32, #tpu.memory_space<vmem>>, %arg8: memref<1x8x32xf32, #tpu.memory_space<vmem>>, %arg9: memref<8x32xf32, #tpu.memory_space<vmem>>, %arg10: memref<8x32xf32, #tpu.memory_space<vmem>>, %arg11: memref<8x32xf32, #tpu.memory_space<vmem>>, %arg12: memref<8x32xf32, #tpu.memory_space<vmem>>) attributes {dimension_semantics = [#tpu.dimension_semantics<parallel>, #tpu.dimension_semantics<arbitrary>], iteration_bounds = array<i64: 2, 1>, scalar_prefetch = 0 : i64, scratch_operands = 4 : i64, tpu.core_type = #tpu.core_type<tc>, window_params = [{transform_indices = @transform_0, window_bounds = array<i64: 1, 8, 32>}, {transform_indices = @transform_1, window_bounds = array<i64: 1, 8, 32>}, {pipeline_mode = #tpu.pipeline_mode<synchronous>, transform_indices = @transform_2, window_bounds = array<i64: 32, 32>}, {pipeline_mode = #tpu.pipeline_mode<synchronous>, transform_indices = @transform_3, window_bounds = array<i64: 32, 96>}, {pipeline_mode = #tpu.pipeline_mode<synchronous>, transform_indices = @transform_4, window_bounds = array<i64: 32, 32>}, {pipeline_mode = #tpu.pipeline_mode<synchronous>, transform_indices = @transform_5, window_bounds = array<i64: 8, 32>}, {transform_indices = @transform_6, window_bounds = array<i64: 1, 8, 32>}]} {
    %c0_i32 = arith.constant 0 : i32
    %0 = arith.cmpi eq, %arg1, %c0_i32 : i32
    %1 = arith.extui %0 : i1 to i32
    %c0_i32_0 = arith.constant 0 : i32
    %2 = arith.cmpi ne, %1, %c0_i32_0 : i32
    scf.if %2 {
      %c0_48 = arith.constant 0 : index
      %c0_49 = arith.constant 0 : index
      %c0_50 = arith.constant 0 : index
      %84 = vector.load %arg2[%c0_48, %c0_49, %c0_50] : memref<1x8x32xf32, #tpu.memory_space<vmem>>, vector<1x8x32xf32>
      %85 = vector.shape_cast %84 : vector<1x8x32xf32> to vector<8x32xf32>
      %c0_51 = arith.constant 0 : index
      %c0_52 = arith.constant 0 : index
      %c0_53 = arith.constant 0 : index
      %86 = vector.load %arg3[%c0_51, %c0_52, %c0_53] : memref<1x8x32xf32, #tpu.memory_space<vmem>>, vector<1x8x32xf32>
      %87 = vector.shape_cast %86 : vector<1x8x32xf32> to vector<8x32xf32>
      %cst_54 = arith.constant 0.000000e+00 : f32
      %88 = vector.broadcast %cst_54 : f32 to vector<8x32xf32>
      %89 = arith.maximumf %87, %88 : vector<8x32xf32>
      %c0_55 = arith.constant 0 : index
      %c0_56 = arith.constant 0 : index
      %90 = vector.load %arg4[%c0_55, %c0_56] : memref<32x32xf32, #tpu.memory_space<vmem>>, vector<32x32xf32>
      %cst_57 = arith.constant dense<0.000000e+00> : vector<8x32xf32>
      %91 = tpu.matmul %89, %90, %cst_57 {dimension_numbers = #tpu.dot_dimension_numbers<[1], [0], [0], [1], [0, 0, 1, 1], [], []>} : vector<8x32xf32>, vector<32x32xf32>, vector<8x32xf32> -> vector<8x32xf32>
      %c0_58 = arith.constant 0 : index
      %c0_59 = arith.constant 0 : index
      %92 = vector.load %arg7[%c0_58, %c0_59] : memref<8x32xf32, #tpu.memory_space<vmem>>, vector<1x32xf32>
      %93 = vector.broadcast %92 : vector<1x32xf32> to vector<8x32xf32>
      %94 = arith.addf %91, %93 : vector<8x32xf32>
      %95 = arith.negf %94 : vector<8x32xf32>
      %96 = math.exp %95 : vector<8x32xf32>
      %cst_60 = arith.constant 1.000000e+00 : f32
      %97 = vector.broadcast %cst_60 : f32 to vector<8x32xf32>
      %98 = arith.addf %97, %96 : vector<8x32xf32>
      %99 = arith.divf %97, %98 : vector<8x32xf32>
      %cst_61 = arith.constant 0.000000e+00 : f32
      %100 = vector.broadcast %cst_61 : f32 to vector<8x32xf32>
      %101 = arith.maximumf %85, %100 : vector<8x32xf32>
      %c0_62 = arith.constant 0 : index
      %c0_63 = arith.constant 0 : index
      %102 = vector.load %arg5[%c0_62, %c0_63] : memref<32x96xf32, #tpu.memory_space<vmem>>, vector<32x96xf32>
      %cst_64 = arith.constant dense<0.000000e+00> : vector<8x96xf32>
      %103 = tpu.matmul %101, %102, %cst_64 {dimension_numbers = #tpu.dot_dimension_numbers<[1], [0], [0], [1], [0, 0, 1, 1], [], []>} : vector<8x32xf32>, vector<32x96xf32>, vector<8x96xf32> -> vector<8x96xf32>
      %cst_65 = arith.constant 1.000000e+00 : f32
      %104 = vector.broadcast %cst_65 : f32 to vector<8x32xf32>
      %105 = arith.addf %104, %99 : vector<8x32xf32>
      %106 = vector.extract_strided_slice %103 {offsets = [0, 0], sizes = [8, 32], strides = [1, 1]} : vector<8x96xf32> to vector<8x32xf32>
      %c1 = arith.constant 1 : index
      %c0_66 = arith.constant 0 : index
      %107 = vector.load %arg7[%c1, %c0_66] : memref<8x32xf32, #tpu.memory_space<vmem>>, vector<1x32xf32>
      %108 = vector.broadcast %107 : vector<1x32xf32> to vector<8x32xf32>
      %109 = arith.addf %106, %108 : vector<8x32xf32>
      %110 = arith.mulf %105, %109 : vector<8x32xf32>
      %c0_67 = arith.constant 0 : index
      %c0_68 = arith.constant 0 : index
      %111 = vector.load %arg9[%c0_67, %c0_68] : memref<8x32xf32, #tpu.memory_space<vmem>>, vector<8x32xf32>
      tpu.vector_store %arg9[%c0_67, %c0_68], %110 {strides = array<i32>} : memref<8x32xf32, #tpu.memory_space<vmem>>, vector<8x32xf32>,
      %112 = vector.extract_strided_slice %103 {offsets = [0, 32], sizes = [8, 32], strides = [1, 1]} : vector<8x96xf32> to vector<8x32xf32>
      %c2 = arith.constant 2 : index
      %c0_69 = arith.constant 0 : index
      %113 = vector.load %arg7[%c2, %c0_69] : memref<8x32xf32, #tpu.memory_space<vmem>>, vector<1x32xf32>
      %114 = vector.broadcast %113 : vector<1x32xf32> to vector<8x32xf32>
      %115 = arith.addf %112, %114 : vector<8x32xf32>
      %116 = arith.mulf %105, %115 : vector<8x32xf32>
      %c0_70 = arith.constant 0 : index
      %c0_71 = arith.constant 0 : index
      %117 = vector.load %arg10[%c0_70, %c0_71] : memref<8x32xf32, #tpu.memory_space<vmem>>, vector<8x32xf32>
      tpu.vector_store %arg10[%c0_70, %c0_71], %116 {strides = array<i32>} : memref<8x32xf32, #tpu.memory_space<vmem>>, vector<8x32xf32>,
      %118 = vector.extract_strided_slice %103 {offsets = [0, 64], sizes = [8, 32], strides = [1, 1]} : vector<8x96xf32> to vector<8x32xf32>
      %c3 = arith.constant 3 : index
      %c0_72 = arith.constant 0 : index
      %119 = vector.load %arg7[%c3, %c0_72] : memref<8x32xf32, #tpu.memory_space<vmem>>, vector<1x32xf32>
      %120 = vector.broadcast %119 : vector<1x32xf32> to vector<8x32xf32>
      %121 = arith.addf %118, %120 : vector<8x32xf32>
      %c0_73 = arith.constant 0 : index
      %c0_74 = arith.constant 0 : index
      %122 = vector.load %arg11[%c0_73, %c0_74] : memref<8x32xf32, #tpu.memory_space<vmem>>, vector<8x32xf32>
      tpu.vector_store %arg11[%c0_73, %c0_74], %121 {strides = array<i32>} : memref<8x32xf32, #tpu.memory_space<vmem>>, vector<8x32xf32>,
    } else {
    }
    %c8_i32 = arith.constant 8 : i32
    %3 = arith.muli %arg1, %c8_i32 : i32
    %4 = tpu.assume_multiple %3, 8 : i32
    %5 = arith.index_cast %4 : i32 to index
    %c0 = arith.constant 0 : index
    %6 = vector.load %arg10[%5, %c0] : memref<8x32xf32, #tpu.memory_space<vmem>>, vector<8x32xf32>
    %7 = vector.extract_strided_slice %6 {offsets = [0, 0], sizes = [8, 8], strides = [1, 1]} : vector<8x32xf32> to vector<8x8xf32>
    %c0_1 = arith.constant 0 : index
    %c0_2 = arith.constant 0 : index
    %8 = vector.load %arg9[%c0_1, %c0_2] : memref<8x32xf32, #tpu.memory_space<vmem>>, vector<8x8xf32>
    %c0_3 = arith.constant 0 : index
    %c0_4 = arith.constant 0 : index
    %9 = vector.load %arg11[%c0_3, %c0_4] : memref<8x32xf32, #tpu.memory_space<vmem>>, vector<8x8xf32>
    %cst = arith.constant dense<0.000000e+00> : vector<8x8xf32>
    %10 = tpu.matmul %7, %8, %cst {dimension_numbers = #tpu.dot_dimension_numbers<[1], [1], [0], [0], [0, 0, 1, 0], [], []>} : vector<8x8xf32>, vector<8x8xf32>, vector<8x8xf32> -> vector<8x8xf32>
    %cst_5 = arith.constant dense<0xFF800000> : vector<8xf32>
    %11 = vector.multi_reduction <maximumf>, %10, %cst_5 [1] : vector<8x8xf32> to vector<8xf32>
    %12 = vector.shape_cast %11 : vector<8xf32> to vector<8x1xf32>
    %13 = vector.broadcast %12 : vector<8x1xf32> to vector<8x8xf32>
    %14 = arith.subf %10, %13 : vector<8x8xf32>
    %15 = math.exp %14 : vector<8x8xf32>
    %cst_6 = arith.constant dense<0.000000e+00> : vector<8xf32>
    %16 = vector.multi_reduction <add>, %15, %cst_6 [1] : vector<8x8xf32> to vector<8xf32>
    %17 = vector.shape_cast %16 : vector<8xf32> to vector<8x1xf32>
    %cst_7 = arith.constant dense<0.000000e+00> : vector<8x8xf32>
    %18 = tpu.matmul %15, %9, %cst_7 {dimension_numbers = #tpu.dot_dimension_numbers<[1], [0], [0], [1], [0, 0, 1, 1], [], []>} : vector<8x8xf32>, vector<8x8xf32>, vector<8x8xf32> -> vector<8x8xf32>
    %19 = tpu.reciprocal %17 {approx = true} : vector<8x1xf32> -> vector<8x1xf32>
    %20 = vector.broadcast %19 : vector<8x1xf32> to vector<8x8xf32>
    %21 = arith.mulf %18, %20 : vector<8x8xf32>
    %c0_8 = arith.constant 0 : index
    %c0_9 = arith.constant 0 : index
    %22 = vector.load %arg12[%c0_8, %c0_9] : memref<8x32xf32, #tpu.memory_space<vmem>>, vector<8x8xf32>
    tpu.vector_store %arg12[%c0_8, %c0_9], %21 {strides = array<i32>} : memref<8x32xf32, #tpu.memory_space<vmem>>, vector<8x8xf32>,
    %23 = vector.extract_strided_slice %6 {offsets = [0, 8], sizes = [8, 8], strides = [1, 1]} : vector<8x32xf32> to vector<8x8xf32>
    %c0_10 = arith.constant 0 : index
    %c8 = arith.constant 8 : index
    %24 = vector.load %arg9[%c0_10, %c8] : memref<8x32xf32, #tpu.memory_space<vmem>>, vector<8x8xf32>
    %c0_11 = arith.constant 0 : index
    %c8_12 = arith.constant 8 : index
    %25 = vector.load %arg11[%c0_11, %c8_12] : memref<8x32xf32, #tpu.memory_space<vmem>>, vector<8x8xf32>
    %cst_13 = arith.constant dense<0.000000e+00> : vector<8x8xf32>
    %26 = tpu.matmul %23, %24, %cst_13 {dimension_numbers = #tpu.dot_dimension_numbers<[1], [1], [0], [0], [0, 0, 1, 0], [], []>} : vector<8x8xf32>, vector<8x8xf32>, vector<8x8xf32> -> vector<8x8xf32>
    %cst_14 = arith.constant dense<0xFF800000> : vector<8xf32>
    %27 = vector.multi_reduction <maximumf>, %26, %cst_14 [1] : vector<8x8xf32> to vector<8xf32>
    %28 = vector.shape_cast %27 : vector<8xf32> to vector<8x1xf32>
    %29 = vector.broadcast %28 : vector<8x1xf32> to vector<8x8xf32>
    %30 = arith.subf %26, %29 : vector<8x8xf32>
    %31 = math.exp %30 : vector<8x8xf32>
    %cst_15 = arith.constant dense<0.000000e+00> : vector<8xf32>
    %32 = vector.multi_reduction <add>, %31, %cst_15 [1] : vector<8x8xf32> to vector<8xf32>
    %33 = vector.shape_cast %32 : vector<8xf32> to vector<8x1xf32>
    %cst_16 = arith.constant dense<0.000000e+00> : vector<8x8xf32>
    %34 = tpu.matmul %31, %25, %cst_16 {dimension_numbers = #tpu.dot_dimension_numbers<[1], [0], [0], [1], [0, 0, 1, 1], [], []>} : vector<8x8xf32>, vector<8x8xf32>, vector<8x8xf32> -> vector<8x8xf32>
    %35 = tpu.reciprocal %33 {approx = true} : vector<8x1xf32> -> vector<8x1xf32>
    %36 = vector.broadcast %35 : vector<8x1xf32> to vector<8x8xf32>
    %37 = arith.mulf %34, %36 : vector<8x8xf32>
    %c0_17 = arith.constant 0 : index
    %c8_18 = arith.constant 8 : index
    %38 = vector.load %arg12[%c0_17, %c8_18] : memref<8x32xf32, #tpu.memory_space<vmem>>, vector<8x8xf32>
    tpu.vector_store %arg12[%c0_17, %c8_18], %37 {strides = array<i32>} : memref<8x32xf32, #tpu.memory_space<vmem>>, vector<8x8xf32>,
    %39 = vector.extract_strided_slice %6 {offsets = [0, 16], sizes = [8, 8], strides = [1, 1]} : vector<8x32xf32> to vector<8x8xf32>
    %c0_19 = arith.constant 0 : index
    %c16 = arith.constant 16 : index
    %40 = vector.load %arg9[%c0_19, %c16] : memref<8x32xf32, #tpu.memory_space<vmem>>, vector<8x8xf32>
    %c0_20 = arith.constant 0 : index
    %c16_21 = arith.constant 16 : index
    %41 = vector.load %arg11[%c0_20, %c16_21] : memref<8x32xf32, #tpu.memory_space<vmem>>, vector<8x8xf32>
    %cst_22 = arith.constant dense<0.000000e+00> : vector<8x8xf32>
    %42 = tpu.matmul %39, %40, %cst_22 {dimension_numbers = #tpu.dot_dimension_numbers<[1], [1], [0], [0], [0, 0, 1, 0], [], []>} : vector<8x8xf32>, vector<8x8xf32>, vector<8x8xf32> -> vector<8x8xf32>
    %cst_23 = arith.constant dense<0xFF800000> : vector<8xf32>
    %43 = vector.multi_reduction <maximumf>, %42, %cst_23 [1] : vector<8x8xf32> to vector<8xf32>
    %44 = vector.shape_cast %43 : vector<8xf32> to vector<8x1xf32>
    %45 = vector.broadcast %44 : vector<8x1xf32> to vector<8x8xf32>
    %46 = arith.subf %42, %45 : vector<8x8xf32>
    %47 = math.exp %46 : vector<8x8xf32>
    %cst_24 = arith.constant dense<0.000000e+00> : vector<8xf32>
    %48 = vector.multi_reduction <add>, %47, %cst_24 [1] : vector<8x8xf32> to vector<8xf32>
    %49 = vector.shape_cast %48 : vector<8xf32> to vector<8x1xf32>
    %cst_25 = arith.constant dense<0.000000e+00> : vector<8x8xf32>
    %50 = tpu.matmul %47, %41, %cst_25 {dimension_numbers = #tpu.dot_dimension_numbers<[1], [0], [0], [1], [0, 0, 1, 1], [], []>} : vector<8x8xf32>, vector<8x8xf32>, vector<8x8xf32> -> vector<8x8xf32>
    %51 = tpu.reciprocal %49 {approx = true} : vector<8x1xf32> -> vector<8x1xf32>
    %52 = vector.broadcast %51 : vector<8x1xf32> to vector<8x8xf32>
    %53 = arith.mulf %50, %52 : vector<8x8xf32>
    %c0_26 = arith.constant 0 : index
    %c16_27 = arith.constant 16 : index
    %54 = vector.load %arg12[%c0_26, %c16_27] : memref<8x32xf32, #tpu.memory_space<vmem>>, vector<8x8xf32>
    tpu.vector_store %arg12[%c0_26, %c16_27], %53 {strides = array<i32>} : memref<8x32xf32, #tpu.memory_space<vmem>>, vector<8x8xf32>,
    %55 = vector.extract_strided_slice %6 {offsets = [0, 24], sizes = [8, 8], strides = [1, 1]} : vector<8x32xf32> to vector<8x8xf32>
    %c0_28 = arith.constant 0 : index
    %c24 = arith.constant 24 : index
    %56 = vector.load %arg9[%c0_28, %c24] : memref<8x32xf32, #tpu.memory_space<vmem>>, vector<8x8xf32>
    %c0_29 = arith.constant 0 : index
    %c24_30 = arith.constant 24 : index
    %57 = vector.load %arg11[%c0_29, %c24_30] : memref<8x32xf32, #tpu.memory_space<vmem>>, vector<8x8xf32>
    %cst_31 = arith.constant dense<0.000000e+00> : vector<8x8xf32>
    %58 = tpu.matmul %55, %56, %cst_31 {dimension_numbers = #tpu.dot_dimension_numbers<[1], [1], [0], [0], [0, 0, 1, 0], [], []>} : vector<8x8xf32>, vector<8x8xf32>, vector<8x8xf32> -> vector<8x8xf32>
    %cst_32 = arith.constant dense<0xFF800000> : vector<8xf32>
    %59 = vector.multi_reduction <maximumf>, %58, %cst_32 [1] : vector<8x8xf32> to vector<8xf32>
    %60 = vector.shape_cast %59 : vector<8xf32> to vector<8x1xf32>
    %61 = vector.broadcast %60 : vector<8x1xf32> to vector<8x8xf32>
    %62 = arith.subf %58, %61 : vector<8x8xf32>
    %63 = math.exp %62 : vector<8x8xf32>
    %cst_33 = arith.constant dense<0.000000e+00> : vector<8xf32>
    %64 = vector.multi_reduction <add>, %63, %cst_33 [1] : vector<8x8xf32> to vector<8xf32>
    %65 = vector.shape_cast %64 : vector<8xf32> to vector<8x1xf32>
    %cst_34 = arith.constant dense<0.000000e+00> : vector<8x8xf32>
    %66 = tpu.matmul %63, %57, %cst_34 {dimension_numbers = #tpu.dot_dimension_numbers<[1], [0], [0], [1], [0, 0, 1, 1], [], []>} : vector<8x8xf32>, vector<8x8xf32>, vector<8x8xf32> -> vector<8x8xf32>
    %67 = tpu.reciprocal %65 {approx = true} : vector<8x1xf32> -> vector<8x1xf32>
    %68 = vector.broadcast %67 : vector<8x1xf32> to vector<8x8xf32>
    %69 = arith.mulf %66, %68 : vector<8x8xf32>
    %c0_35 = arith.constant 0 : index
    %c24_36 = arith.constant 24 : index
    %70 = vector.load %arg12[%c0_35, %c24_36] : memref<8x32xf32, #tpu.memory_space<vmem>>, vector<8x8xf32>
    tpu.vector_store %arg12[%c0_35, %c24_36], %69 {strides = array<i32>} : memref<8x32xf32, #tpu.memory_space<vmem>>, vector<8x8xf32>,
    %c0_37 = arith.constant 0 : index
    %71 = arith.index_cast %4 : i32 to index
    %c0_38 = arith.constant 0 : index
    %72 = vector.load %arg2[%c0_37, %71, %c0_38] : memref<1x8x32xf32, #tpu.memory_space<vmem>>, vector<1x8x32xf32>
    %73 = vector.shape_cast %72 : vector<1x8x32xf32> to vector<8x32xf32>
    %c0_39 = arith.constant 0 : index
    %c0_40 = arith.constant 0 : index
    %74 = vector.load %arg12[%c0_39, %c0_40] : memref<8x32xf32, #tpu.memory_space<vmem>>, vector<8x32xf32>
    %75 = arith.addf %73, %74 : vector<8x32xf32>
    %c0_41 = arith.constant 0 : index
    %c0_42 = arith.constant 0 : index
    %76 = vector.load %arg6[%c0_41, %c0_42] : memref<32x32xf32, #tpu.memory_space<vmem>>, vector<32x32xf32>
    %cst_43 = arith.constant dense<0.000000e+00> : vector<8x32xf32>
    %77 = tpu.matmul %75, %76, %cst_43 {dimension_numbers = #tpu.dot_dimension_numbers<[1], [0], [0], [1], [0, 0, 1, 1], [], []>} : vector<8x32xf32>, vector<32x32xf32>, vector<8x32xf32> -> vector<8x32xf32>
    %c4 = arith.constant 4 : index
    %c0_44 = arith.constant 0 : index
    %78 = vector.load %arg7[%c4, %c0_44] : memref<8x32xf32, #tpu.memory_space<vmem>>, vector<1x32xf32>
    %79 = vector.broadcast %78 : vector<1x32xf32> to vector<8x32xf32>
    %80 = arith.addf %77, %79 : vector<8x32xf32>
    %c0_45 = arith.constant 0 : index
    %c0_46 = arith.constant 0 : index
    %c0_47 = arith.constant 0 : index
    %81 = vector.load %arg8[%c0_45, %c0_46, %c0_47] : memref<1x8x32xf32, #tpu.memory_space<vmem>>, vector<1x8x32xf32>
    %82 = vector.shape_cast %81 : vector<1x8x32xf32> to vector<8x32xf32>
    %83 = vector.shape_cast %80 : vector<8x32xf32> to vector<1x8x32xf32>
    tpu.vector_store %arg8[%c0_45, %c0_46, %c0_47], %83 {strides = array<i32>} : memref<1x8x32xf32, #tpu.memory_space<vmem>>, vector<1x8x32xf32>,
    return
  }
  func.func @transform_0(%arg0: i32, %arg1: i32) -> (i32, i32, i32) {
    %c0_i32 = arith.constant 0 : i32
    %c0_i32_0 = arith.constant 0 : i32
    %c0_i32_1 = arith.constant 0 : i32
    return %arg0, %c0_i32, %c0_i32_0 : i32, i32, i32
  }
  func.func @transform_1(%arg0: i32, %arg1: i32) -> (i32, i32, i32) {
    %c0_i32 = arith.constant 0 : i32
    %c0_i32_0 = arith.constant 0 : i32
    %c0_i32_1 = arith.constant 0 : i32
    return %arg0, %c0_i32, %c0_i32_0 : i32, i32, i32
  }
  func.func @transform_2(%arg0: i32, %arg1: i32) -> (i32, i32) {
    %c0_i32 = arith.constant 0 : i32
    %c0_i32_0 = arith.constant 0 : i32
    %c0_i32_1 = arith.constant 0 : i32
    return %c0_i32, %c0_i32_0 : i32, i32
  }
  func.func @transform_3(%arg0: i32, %arg1: i32) -> (i32, i32) {
    %c0_i32 = arith.constant 0 : i32
    %c0_i32_0 = arith.constant 0 : i32
    %c0_i32_1 = arith.constant 0 : i32
    return %c0_i32, %c0_i32_0 : i32, i32
  }
  func.func @transform_4(%arg0: i32, %arg1: i32) -> (i32, i32) {
    %c0_i32 = arith.constant 0 : i32
    %c0_i32_0 = arith.constant 0 : i32
    %c0_i32_1 = arith.constant 0 : i32
    return %c0_i32, %c0_i32_0 : i32, i32
  }
  func.func @transform_5(%arg0: i32, %arg1: i32) -> (i32, i32) {
    %c0_i32 = arith.constant 0 : i32
    %c0_i32_0 = arith.constant 0 : i32
    %c0_i32_1 = arith.constant 0 : i32
    return %c0_i32, %c0_i32_0 : i32, i32
  }
  func.func @transform_6(%arg0: i32, %arg1: i32) -> (i32, i32, i32) {
    %c0_i32 = arith.constant 0 : i32
    %c0_i32_0 = arith.constant 0 : i32
    return %arg0, %arg1, %c0_i32 : i32, i32, i32
  }
}

</mosaic_0001>

<llo_original>
// kernel: tpu_custom_call.1
$region0: #{tpu_custom_call.1}
  #allocation0 [shape = 'u32[]', space=smem, size = 0x4, offset = 0x4, fixed_abs, tag = 'smem constant byte address 0x4 - core index']
  #allocation1 [shape = 'u32[144,128]{1,0:T(1,128)}', space=vmem, size = 0x12000, scoped, tag = 'internal scratch']
  #allocation2 [shape = 'f32[8,32]{1,0:T(8,128)}', space=vmem, size = 0x1000, scoped, tag = 'scratch operand']
  #allocation3 [shape = 'f32[8,32]{1,0:T(8,128)}', space=vmem, size = 0x1000, scoped, tag = 'scratch operand']
  #allocation4 [shape = 'f32[8,32]{1,0:T(8,128)}', space=vmem, size = 0x1000, scoped, tag = 'scratch operand']
  #allocation5 [shape = 'f32[8,32]{1,0:T(8,128)}', space=vmem, size = 0x1000, scoped, tag = 'scratch operand']
  %s0 = inlined_call_operand.hbm [shape: f32[2,8,32], index: 0, kind: input, shape index: {}]
  %s1 = inlined_call_operand.hbm [shape: f32[2,8,32], index: 1, kind: input, shape index: {}]
  %s2 = inlined_call_operand.hbm [shape: f32[32,32], index: 2, kind: input, shape index: {}]
  %s3 = inlined_call_operand.hbm [shape: f32[32,96], index: 3, kind: input, shape index: {}]
  %s4 = inlined_call_operand.hbm [shape: f32[32,32], index: 4, kind: input, shape index: {}]
  %s5 = inlined_call_operand.vmem [shape: f32[8,32], index: 5, kind: input, shape index: {}]
  %s6 = inlined_call_operand.hbm [shape: f32[2,8,32], index: 6, kind: output, shape index: {}]
  %s7 = sld [smem:[#allocation0]]
  $region81: #{tpu_custom_call.1} parent=0
    _
  %s9 = ssub.s32 1, %s7
  %s10 = scalar_select 0, %s9, %s7
  $region1: #{tpu_custom_call.1} parent=0
    #allocation6 [shape = 'u8[8192]{0}', space=vmem, size = 0x2000, scoped, tag = 'input window, operand 0']
    #allocation7 [shape = 's32[2]{0}', space=sflag, size = 0x8, scoped, tag = 'scoped memory for tpu_custom_call.1']
    #allocation8 [shape = 's32[2]{0}', space=sflag, size = 0x8, scoped, tag = 'scoped memory for tpu_custom_call.1']
    #allocation9 [shape = 'u8[8192]{0}', space=vmem, size = 0x2000, scoped, tag = 'input window, operand 1']
    #allocation10 [shape = 's32[2]{0}', space=sflag, size = 0x8, scoped, tag = 'scoped memory for tpu_custom_call.1']
    #allocation11 [shape = 'u8[16384]{0}', space=vmem, size = 0x4000, scoped, tag = 'input window, operand 2, single buffered']
    #allocation12 [shape = 'u8[16384]{0}', space=vmem, size = 0x4000, scoped, tag = 'input window, operand 3, single buffered']
    #allocation13 [shape = 's32[1]{0}', space=sflag, size = 0x4, scoped, tag = 'scoped memory for tpu_custom_call.1']
    #allocation14 [shape = 'u8[16384]{0}', space=vmem, size = 0x4000, scoped, tag = 'input window, operand 4, single buffered']
    #allocation15 [shape = 'u8[8192]{0}', space=vmem, size = 0x2000, scoped, tag = 'output window, operand 0']
    %11 = vsyncpa [#allocation7], 0
    %s12 = scalar_lea.sflag [#allocation7], 1
    %13 = vsyncpa %s12, 0
    %14 = vsyncpa [#allocation10], 0
    %s15 = scalar_lea.sflag [#allocation10], 1
    %16 = vsyncpa %s15, 0
    %17 = vsyncpa [#allocation13], 0
    %18 = vsyncpa [#allocation8], 0
    %s19 = scalar_lea.sflag [#allocation8], 1
    %20 = vsyncpa %s19, 0
    loop: start=0, step=1, limit=4
    $region2: #{tpu_custom_call.1} parent=1 // loop_pre_header
      _
    $region3: #{tpu_custom_call.1} parent=1 // loop_header
      %s22 = sphi 0, %s26
      %p23 = scmp.ge.s32.totalorder %s22, 4
      %s29 = sphi 0, %s41
      %s30 = sphi 0, %s37
      %s31 = sphi 0, %s29
      %s32 = sphi 0, %s30
      %s33 = sphi 0, %s31
      %s34 = sphi 0, %s32
      %s44 = sphi 0, %s46
      %s47 = sphi 0, %s44
      %s48 = sphi 0, %s47
      %s64 = sphi 0, %s48
      %s70 = sphi 0, %s72
      %s73 = sphi 0, %s70
      %s74 = sphi 0, %s73
      %s90 = sphi 0, %s74
      %s94 = sphi 0, %s94
      %s96 = sphi 0, %s94
      %s97 = sphi 0, %s96
      %s111 = sphi 0, %s97
      %s115 = sphi 0, %s115
      %s117 = sphi 0, %s115
      %s118 = sphi 0, %s117
      %s132 = sphi 0, %s118
      %s136 = sphi 0, %s136
      %s138 = sphi 0, %s136
      %s139 = sphi 0, %s138
      %s153 = sphi 0, %s139
      %s157 = sphi 0, %s157
      %s159 = sphi 0, %s157
      %s160 = sphi 0, %s159
      %s174 = sphi 0, %s160
      %s182 = sphi 0, %s184
      %s185 = sphi 0, %s182
      %s186 = sphi 0, %s185
      %s202 = sphi 0, %s186
    $region4: #{tpu_custom_call.1} parent=1 // loop_header_branch
      %25 = sbr.rel (%p23) target = $region8
    $region5: #{tpu_custom_call.1} parent=1 // loop_body
      %s27 = ssub.s32 %s22, 1
      %s28 = ssub.s32 %s22, 2
      %s35 = sadd.s32 1, %s30
      %p36 = scmp.ge.s32.totalorder %s35, 1
      %s37 = scalar_select %p36, 0, %s35
      %s38 = sadd.s32 1, %s29
      %s39 = scalar_select %p36, %s38, %s29
      %p40 = scmp.ge.s32.totalorder %s39, 2
      %s41 = scalar_select %p40, 0, %s39
      %s42 = ssub.s32 %s29, %s41
      %p43 = scmp.eq.s32.totalorder %s42, 0
      %s45 = sadd.s32 %s44, 1
      %s46 = scalar_select %p43, %s44, %s45
      %p49 = pneg %p43
      %p50 = scmp.eq.s32.totalorder %s22, 1
      %p51 = por %p49, %p50
      %p52 = scmp.ne.s32.totalorder %s44, %s47
      %p53 = scmp.eq.s32.totalorder %s22, 0
      %p54 = por %p52, %p53
      %p55 = scmp.ne.s32.totalorder %s44, %s47
      %p56 = scmp.eq.s32.totalorder %s27, 1
      %p57 = por %p55, %p56
      %p58 = scmp.ne.s32.totalorder %s47, %s48
      %p59 = scmp.eq.s32.totalorder %s27, 0
      %p60 = por %p58, %p59
      %p61 = scmp.ne.s32.totalorder %s47, %s48
      %p62 = scmp.eq.s32.totalorder %s28, 1
      %p63 = por %p61, %p62
      %p65 = scmp.ne.s32.totalorder %s48, %s64
      %p66 = scmp.eq.s32.totalorder %s28, 0
      %p67 = por %p65, %p66
      %s68 = ssub.s32 %s29, %s41
      %p69 = scmp.eq.s32.totalorder %s68, 0
      %s71 = sadd.s32 %s70, 1
      %s72 = scalar_select %p69, %s70, %s71
      %p75 = pneg %p69
      %p76 = scmp.eq.s32.totalorder %s22, 1
      %p77 = por %p75, %p76
      %p78 = scmp.ne.s32.totalorder %s70, %s73
      %p79 = scmp.eq.s32.totalorder %s22, 0
      %p80 = por %p78, %p79
      %p81 = scmp.ne.s32.totalorder %s70, %s73
      %p82 = scmp.eq.s32.totalorder %s27, 1
      %p83 = por %p81, %p82
      %p84 = scmp.ne.s32.totalorder %s73, %s74
      %p85 = scmp.eq.s32.totalorder %s27, 0
      %p86 = por %p84, %p85
      %p87 = scmp.ne.s32.totalorder %s73, %s74
      %p88 = scmp.eq.s32.totalorder %s28, 1
      %p89 = por %p87, %p88
      %p91 = scmp.ne.s32.totalorder %s74, %s90
      %p92 = scmp.eq.s32.totalorder %s28, 0
      %p93 = por %p91, %p92
      %s95 = sadd.s32 %s94, 1
      %p98 = scmp.eq.s32.totalorder %s22, 1
      %p99 = scmp.ne.s32.totalorder %s94, %s96
      %p100 = scmp.eq.s32.totalorder %s22, 0
      %p101 = por %p99, %p100
      %p102 = scmp.ne.s32.totalorder %s94, %s96
      %p103 = scmp.eq.s32.totalorder %s27, 1
      %p104 = por %p102, %p103
      %p105 = scmp.ne.s32.totalorder %s96, %s97
      %p106 = scmp.eq.s32.totalorder %s27, 0
      %p107 = por %p105, %p106
      %p108 = scmp.ne.s32.totalorder %s96, %s97
      %p109 = scmp.eq.s32.totalorder %s28, 1
      %p110 = por %p108, %p109
      %p112 = scmp.ne.s32.totalorder %s97, %s111
      %p113 = scmp.eq.s32.totalorder %s28, 0
      %p114 = por %p112, %p113
      %s116 = sadd.s32 %s115, 1
      %p119 = scmp.eq.s32.totalorder %s22, 1
      %p120 = scmp.ne.s32.totalorder %s115, %s117
      %p121 = scmp.eq.s32.totalorder %s22, 0
      %p122 = por %p120, %p121
      %p123 = scmp.ne.s32.totalorder %s115, %s117
      %p124 = scmp.eq.s32.totalorder %s27, 1
      %p125 = por %p123, %p124
      %p126 = scmp.ne.s32.totalorder %s117, %s118
      %p127 = scmp.eq.s32.totalorder %s27, 0
      %p128 = por %p126, %p127
      %p129 = scmp.ne.s32.totalorder %s117, %s118
      %p130 = scmp.eq.s32.totalorder %s28, 1
      %p131 = por %p129, %p130
      %p133 = scmp.ne.s32.totalorder %s118, %s132
      %p134 = scmp.eq.s32.totalorder %s28, 0
      %p135 = por %p133, %p134
      %s137 = sadd.s32 %s136, 1
      %p140 = scmp.eq.s32.totalorder %s22, 1
      %p141 = scmp.ne.s32.totalorder %s136, %s138
      %p142 = scmp.eq.s32.totalorder %s22, 0
      %p143 = por %p141, %p142
      %p144 = scmp.ne.s32.totalorder %s136, %s138
      %p145 = scmp.eq.s32.totalorder %s27, 1
      %p146 = por %p144, %p145
      %p147 = scmp.ne.s32.totalorder %s138, %s139
      %p148 = scmp.eq.s32.totalorder %s27, 0
      %p149 = por %p147, %p148
      %p150 = scmp.ne.s32.totalorder %s138, %s139
      %p151 = scmp.eq.s32.totalorder %s28, 1
      %p152 = por %p150, %p151
      %p154 = scmp.ne.s32.totalorder %s139, %s153
      %p155 = scmp.eq.s32.totalorder %s28, 0
      %p156 = por %p154, %p155
      %s158 = sadd.s32 %s157, 1
      %p161 = scmp.eq.s32.totalorder %s22, 1
      %p162 = scmp.ne.s32.totalorder %s157, %s159
      %p163 = scmp.eq.s32.totalorder %s22, 0
      %p164 = por %p162, %p163
      %p165 = scmp.ne.s32.totalorder %s157, %s159
      %p166 = scmp.eq.s32.totalorder %s27, 1
      %p167 = por %p165, %p166
      %p168 = scmp.ne.s32.totalorder %s159, %s160
      %p169 = scmp.eq.s32.totalorder %s27, 0
      %p170 = por %p168, %p169
      %p171 = scmp.ne.s32.totalorder %s159, %s160
      %p172 = scmp.eq.s32.totalorder %s28, 1
      %p173 = por %p171, %p172
      %p175 = scmp.ne.s32.totalorder %s160, %s174
      %p176 = scmp.eq.s32.totalorder %s28, 0
      %p177 = por %p175, %p176
      %s178 = ssub.s32 %s29, %s41
      %s179 = ssub.s32 %s30, %s37
      %s180 = sor.u32 %s178, %s179
      %p181 = scmp.eq.s32.totalorder %s180, 0
      %s183 = sadd.s32 %s182, 1
      %s184 = scalar_select %p181, %s182, %s183
      %p187 = pneg %p181
      %p188 = scmp.eq.s32.totalorder %s22, 1
      %p189 = por %p187, %p188
      %p190 = scmp.ne.s32.totalorder %s182, %s185
      %p191 = scmp.eq.s32.totalorder %s22, 0
      %p192 = por %p190, %p191
      %p193 = scmp.ne.s32.totalorder %s182, %s185
      %p194 = scmp.eq.s32.totalorder %s27, 1
      %p195 = por %p193, %p194
      %p196 = scmp.ne.s32.totalorder %s185, %s186
      %p197 = scmp.eq.s32.totalorder %s27, 0
      %p198 = por %p196, %p197
      %p199 = scmp.ne.s32.totalorder %s185, %s186
      %p200 = scmp.eq.s32.totalorder %s28, 1
      %p201 = por %p199, %p200
      %p203 = scmp.ne.s32.totalorder %s186, %s202
      %p204 = scmp.eq.s32.totalorder %s28, 0
      %p205 = por %p203, %p204
      %p206 = scmp.le.s32.totalorder 1, %s22
      %p207 = scmp.lt.s32.totalorder %s22, 3
      %p208 = pnand %p206, %p207
      %p209 = pneg %p208
      // Predicated region
      $region9: #{tpu_custom_call.1} parent=5 // pred_check
        _
      $region10: #{tpu_custom_call.1} parent=5 // pred_check_branch
        %211 = sbr.rel (%p208) target = $region12
      $region11: #{tpu_custom_call.1} parent=5 // pred_region
        %s212 = ssub.s32 %s22, 1
        // Predicated region
        $region13: #{tpu_custom_call.1} parent=11 // pred_check
          %p213 = pneg %p107
        $region14: #{tpu_custom_call.1} parent=11 // pred_check_branch
          %215 = sbr.rel (%p213) target = $region16
        $region15: #{tpu_custom_call.1} parent=11 // pred_region
          %s217 = ssub.s32 512, 512
          %218 = vsyncadd [#allocation10], %s217
          %s219 = sshll.u32 [#allocation11], 4
          %s220 = int_to_ptr.vmem [resolvable:$true] %s219
          %225 = dma.hbm_to_vmem [thread:$0]  %s2, 512, %s220, [#allocation10], 128, 128, 8
        $region16: #{tpu_custom_call.1} parent=11 // pred_fallthru
          _
        // Predicated region
        $region17: #{tpu_custom_call.1} parent=11 // pred_check
          %p226 = pneg %p128
        $region18: #{tpu_custom_call.1} parent=11 // pred_check_branch
          %228 = sbr.rel (%p226) target = $region20
        $region19: #{tpu_custom_call.1} parent=11 // pred_region
          %s230 = ssub.s32 512, 512
          %231 = vsyncadd [#allocation13], %s230
          %s232 = sshll.u32 [#allocation12], 4
          %s233 = int_to_ptr.vmem [resolvable:$true] %s232
          %238 = dma.hbm_to_vmem [thread:$0]  %s3, 512, %s233, [#allocation13], 128, 128, 8
        $region20: #{tpu_custom_call.1} parent=11 // pred_fallthru
          _
        // Predicated region
        $region21: #{tpu_custom_call.1} parent=11 // pred_check
          %p239 = pneg %p149
        $region22: #{tpu_custom_call.1} parent=11 // pred_check_branch
          %241 = sbr.rel (%p239) target = $region24
        $region23: #{tpu_custom_call.1} parent=11 // pred_region
          %s243 = ssub.s32 512, 512
          %244 = vsyncadd [#allocation13], %s243
          %s245 = sshll.u32 [#allocation14], 4
          %s246 = int_to_ptr.vmem [resolvable:$true] %s245
          %251 = dma.hbm_to_vmem [thread:$0]  %s4, 512, %s246, [#allocation13], 128, 128, 8
        $region24: #{tpu_custom_call.1} parent=11 // pred_fallthru
          _
        // Predicated region
        $region25: #{tpu_custom_call.1} parent=11 // pred_check
          %p252 = pneg %p170
        $region26: #{tpu_custom_call.1} parent=11 // pred_check_branch
          %254 = sbr.rel (%p252) target = $region28
        $region27: #{tpu_custom_call.1} parent=11 // pred_region
          _
        $region28: #{tpu_custom_call.1} parent=11 // pred_fallthru
          _
      $region12: #{tpu_custom_call.1} parent=5 // pred_fallthru
        _
      %p255 = scmp.lt.s32.totalorder %s22, 2
      // Predicated region
      $region29: #{tpu_custom_call.1} parent=5 // pred_check
        %p256 = pneg %p255
      $region30: #{tpu_custom_call.1} parent=5 // pred_check_branch
        %258 = sbr.rel (%p256) target = $region32
      $region31: #{tpu_custom_call.1} parent=5 // pred_region
        // Predicated region
        $region33: #{tpu_custom_call.1} parent=31 // pred_check
          %p259 = pneg %p54
        $region34: #{tpu_custom_call.1} parent=31 // pred_check_branch
          %261 = sbr.rel (%p259) target = $region36
        $region35: #{tpu_custom_call.1} parent=31 // pred_region
          %s262 = sand.u32 %s44, 1
          %s263 = scalar_lea.sflag [#allocation7], %s262
          %s264 = sand.u32 %s44, 1
          %s265 = smul.addr %s264, 8
          %s266 = scalar_lea.vmem [#allocation6], %s265
          %s268 = ssub.s32 128, 128
          %269 = vsyncadd %s263, %s268
          %s270 = smul.addr %s29, 128
          %s271 = scalar_lea.hbm %s0, %s270
          %s273 = sshll.u32 %s266, 4
          %s274 = int_to_ptr.vmem [resolvable:$true] %s273
          %276 = dma.hbm_to_vmem [thread:$0]  %s271, 128, %s274, %s263
        $region36: #{tpu_custom_call.1} parent=31 // pred_fallthru
          _
        // Predicated region
        $region37: #{tpu_custom_call.1} parent=31 // pred_check
          %p277 = pneg %p80
        $region38: #{tpu_custom_call.1} parent=31 // pred_check_branch
          %279 = sbr.rel (%p277) target = $region40
        $region39: #{tpu_custom_call.1} parent=31 // pred_region
          %s280 = sand.u32 %s22, 1
          %s281 = scalar_lea.sflag [#allocation10], %s280
          %s282 = sand.u32 %s70, 1
          %s283 = smul.addr %s282, 8
          %s284 = scalar_lea.vmem [#allocation9], %s283
          %s286 = ssub.s32 128, 128
          %287 = vsyncadd %s281, %s286
          %s288 = smul.addr %s29, 128
          %s289 = scalar_lea.hbm %s1, %s288
          %s291 = sshll.u32 %s284, 4
          %s292 = int_to_ptr.vmem [resolvable:$true] %s291
          %294 = dma.hbm_to_vmem [thread:$0]  %s289, 128, %s292, %s281
        $region40: #{tpu_custom_call.1} parent=31 // pred_fallthru
          _
      $region32: #{tpu_custom_call.1} parent=5 // pred_fallthru
        _
      %p295 = scmp.le.s32.totalorder 1, %s22
      %p296 = scmp.lt.s32.totalorder %s22, 3
      %p297 = pnand %p295, %p296
      %p298 = pneg %p297
      // Predicated region
      $region41: #{tpu_custom_call.1} parent=5 // pred_check
        _
      $region42: #{tpu_custom_call.1} parent=5 // pred_check_branch
        %300 = sbr.rel (%p297) target = $region44
      $region43: #{tpu_custom_call.1} parent=5 // pred_region
        %s301 = ssub.s32 %s22, 1
        %s302 = sand.u32 %s47, 1
        %s303 = scalar_lea.sflag [#allocation7], %s302
        %s304 = sand.u32 %s47, 1
        %s305 = smul.addr %s304, 8
        %s306 = scalar_lea.vmem [#allocation6], %s305
        // Predicated region
        $region45: #{tpu_custom_call.1} parent=43 // pred_check
          %p307 = pneg %p60
        $region46: #{tpu_custom_call.1} parent=43 // pred_check_branch
          %309 = sbr.rel (%p307) target = $region48
        $region47: #{tpu_custom_call.1} parent=43 // pred_region
          %310 = dma.done %s303, 128
        $region48: #{tpu_custom_call.1} parent=43 // pred_fallthru
          _
        %s311 = sand.u32 %s27, 1
        %s312 = scalar_lea.sflag [#allocation10], %s311
        %s313 = sand.u32 %s73, 1
        %s314 = smul.addr %s313, 8
        %s315 = scalar_lea.vmem [#allocation9], %s314
        // Predicated region
        $region49: #{tpu_custom_call.1} parent=43 // pred_check
          %p316 = pneg %p86
        $region50: #{tpu_custom_call.1} parent=43 // pred_check_branch
          %318 = sbr.rel (%p316) target = $region52
        $region51: #{tpu_custom_call.1} parent=43 // pred_region
          %319 = dma.done %s312, 128
        $region52: #{tpu_custom_call.1} parent=43 // pred_fallthru
          _
        // Predicated region
        $region53: #{tpu_custom_call.1} parent=43 // pred_check
          %p320 = pneg %p107
        $region54: #{tpu_custom_call.1} parent=43 // pred_check_branch
          %322 = sbr.rel (%p320) target = $region56
        $region55: #{tpu_custom_call.1} parent=43 // pred_region
          %323 = dma.done [#allocation10], 512
        $region56: #{tpu_custom_call.1} parent=43 // pred_fallthru
          _
        // Predicated region
        $region57: #{tpu_custom_call.1} parent=43 // pred_check
          %p324 = pneg %p128
        $region58: #{tpu_custom_call.1} parent=43 // pred_check_branch
          %326 = sbr.rel (%p324) target = $region60
        $region59: #{tpu_custom_call.1} parent=43 // pred_region
          %327 = dma.done [#allocation13], 512
        $region60: #{tpu_custom_call.1} parent=43 // pred_fallthru
          _
        // Predicated region
        $region61: #{tpu_custom_call.1} parent=43 // pred_check
          %p328 = pneg %p149
        $region62: #{tpu_custom_call.1} parent=43 // pred_check_branch
          %330 = sbr.rel (%p328) target = $region64
        $region63: #{tpu_custom_call.1} parent=43 // pred_region
          %331 = dma.done [#allocation13], 512
        $region64: #{tpu_custom_call.1} parent=43 // pred_fallthru
          _
        %s332 = sand.u32 %s47, 1
        %s333 = scalar_lea.sflag [#allocation7], %s332
        %s334 = sand.u32 %s47, 1
        %s335 = smul.addr %s334, 8
        %s336 = scalar_lea.vmem [#allocation6], %s335
        %p337 = pneg %p60
        %p338 = pneg %p57
        %s339 = sand.u32 %s27, 1
        %s340 = scalar_lea.sflag [#allocation10], %s339
        %s341 = sand.u32 %s73, 1
        %s342 = smul.addr %s341, 8
        %s343 = scalar_lea.vmem [#allocation9], %s342
        %p344 = pneg %p86
        %p345 = pneg %p83
        %p346 = pneg %p107
        %p347 = pneg %p104
        %p348 = pneg %p128
        %p349 = pneg %p125
        %p350 = pneg %p149
        %p351 = pneg %p146
        %p352 = pneg %p170
        %p353 = pneg %p167
        %p354 = pneg %p198
        %p355 = pneg %p195
        %s356 = sand.u32 %s185, 1
        %s357 = scalar_lea.sflag [#allocation8], %s356
        %s358 = sand.u32 %s185, 1
        %s359 = smul.addr %s358, 8
        %s360 = scalar_lea.vmem [#allocation15], %s359
        %p361 = scmp.eq.s32.totalorder %s32, 0
        // Predicated region
        $region65: #{tpu_custom_call.1} parent=43 // pred_check
          %p362 = pneg %p361
        $region66: #{tpu_custom_call.1} parent=43 // pred_check_branch
          %364 = sbr.rel (%p362) target = $region68
        $region67: #{tpu_custom_call.1} parent=43 // pred_region
          %v365 = vld [vmem:[%s306] sm:$0xff]
          %v366 = vld [vmem:[%s315] sm:$0xff]
          %v367 = vmax.f32 %v366, 0.0
          %v368 = vld [vmem:[#allocation11] sm:$0xff]
          %v369 = vld [vmem:[#allocation11 + $0x8] sm:$0xff]
          %v370 = vld [vmem:[#allocation11 + $0x10] sm:$0xff]
          %v371 = vld [vmem:[#allocation11 + $0x18] sm:$0xff]
          %v372 = vld [vmem:[%s5] sm:$0x1]
          %v373 = vlaneseq
          %v374 = vshrl.u32 %v373, 7
          %v375 = vsub.s32 0, %v374
          %v376 = vrot.slane %v372, %v375
          %vm377 = vcmask 261120
          %v379 = vsel %vm377, %v367, 0
          %381 = vmatprep.subr.mxu0 0.0
          %382 = vmatpush1.msra.mxu0 %v368
          %383 = vmatprep.subr.mxu0 0.0
          %384 = vmatpush1.msra.mxu0 %v369
          %385 = vmatprep.subr.mxu0 0.0
          %386 = vmatpush1.msra.mxu0 %v370
          %387 = vmatprep.subr.mxu0 0.0
          %388 = vmatpush1.msra.mxu0 %v371
          %389 = vmatprep.subr.mxu0 0.0
          %390 = vmatpush1.msra.mxu0 0.0
          %391 = vmatprep.subr.mxu0 0.0
          %392 = vmatpush1.msra.mxu0 0.0
          %393 = vmatprep.subr.mxu0 0.0
          %394 = vmatpush1.msra.mxu0 0.0
          %395 = vmatprep.subr.mxu0 0.0
          %396 = vmatpush1.msra.mxu0 0.0
          %397 = vmatprep.subr.mxu0 0.0
          %398 = vmatpush1.msra.mxu0 0.0
          %399 = vmatprep.subr.mxu0 0.0
          %400 = vmatpush1.msra.mxu0 0.0
          %401 = vmatprep.subr.mxu0 0.0
          %402 = vmatpush1.msra.mxu0 0.0
          %403 = vmatprep.subr.mxu0 0.0
          %404 = vmatpush1.msra.mxu0 0.0
          %405 = vmatprep.subr.mxu0 0.0
          %406 = vmatpush1.msra.mxu0 0.0
          %407 = vmatprep.subr.mxu0 0.0
          %408 = vmatpush1.msra.mxu0 0.0
          %409 = vmatprep.subr.mxu0 0.0
          %410 = vmatpush1.msra.mxu0 0.0
          %411 = vmatprep.subr.mxu0 0.0
          %412 = vmatpush1.msra.mxu0 0.0
          %413 = vmatprep.subr.mxu0 0.0
          %414 = vmatpush1.msra.mxu0 0.0
          %415 = vmatprep.subr.mxu0 0.0
          %416 = vmatpush1.msra.mxu0 0.0
          %417 = vmatprep.subr.mxu0 0.0
          %418 = vmatpush1.msra.mxu0 0.0
          %419 = vmatprep.subr.mxu0 0.0
          %420 = vmatpush1.msra.mxu0 0.0
          %421 = vmatprep.subr.mxu0 0.0
          %422 = vmatpush1.msra.mxu0 0.0
          %423 = vmatprep.subr.mxu0 0.0
          %424 = vmatpush1.msra.mxu0 0.0
          %425 = vmatprep.subr.mxu0 0.0
          %426 = vmatpush1.msra.mxu0 0.0
          %427 = vmatprep.subr.mxu0 0.0
          %428 = vmatpush1.msra.mxu0 0.0
          %429 = vmatprep.subr.mxu0 0.0
          %430 = vmatpush1.msra.mxu0 0.0
          %431 = vmatprep.subr.mxu0 0.0
          %432 = vmatpush1.msra.mxu0 0.0
          %433 = vmatprep.subr.mxu0 0.0
          %434 = vmatpush1.msra.mxu0 0.0
          %435 = vmatprep.subr.mxu0 0.0
          %436 = vmatpush1.msra.mxu0 0.0
          %437 = vmatprep.subr.mxu0 0.0
          %438 = vmatpush1.msra.mxu0 0.0
          %439 = vmatprep.subr.mxu0 0.0
          %440 = vmatpush1.msra.mxu0 0.0
          %441 = vmatprep.subr.mxu0 0.0
          %442 = vmatpush1.msra.mxu0 0.0
          %443 = vmatprep.subr.mxu0 0.0
          %444 = vmatpush1.msra.mxu0 0.0
          %445 = vmatprep.mubr.f32.mxu0 0.0
          %446 = vmatmul.mubr.f32.gmra.mrb[0].mxu0 %v379
          %v447 = vpop.f32.mrb[0].mxu0
          %v448 = vadd.f32 %v376, %v447
          %v449 = vpop.f32.mrb[0].mxu0
          %450 = vdwg.mxu0
          %v451 = vxor.u32 %v448, 2147483648
          %v452 = vmul.f32 %v451, 1.442695
          %v453 = vpow.pop %v452
          %v454 = vadd.f32 %v453, 1.0
          %v455 = vrcp.pop %v454
          %v456 = vmul.f32 1.0, %v455
          %v457 = vmax.f32 %v365, 0.0
          %v458 = vld [vmem:[#allocation12] sm:$0xff]
          %v459 = vld [vmem:[#allocation12 + $0x8] sm:$0xff]
          %v460 = vld [vmem:[#allocation12 + $0x10] sm:$0xff]
          %v461 = vld [vmem:[#allocation12 + $0x18] sm:$0xff]
          %v463 = vsel %vm377, %v457, 0
          %465 = vmatprep.subr.mxu0 0.0
          %466 = vmatpush1.msra.mxu0 %v458
          %467 = vmatprep.subr.mxu0 0.0
          %468 = vmatpush1.msra.mxu0 %v459
          %469 = vmatprep.subr.mxu0 0.0
          %470 = vmatpush1.msra.mxu0 %v460
          %471 = vmatprep.subr.mxu0 0.0
          %472 = vmatpush1.msra.mxu0 %v461
          %473 = vmatprep.subr.mxu0 0.0
          %474 = vmatpush1.msra.mxu0 0.0
          %475 = vmatprep.subr.mxu0 0.0
          %476 = vmatpush1.msra.mxu0 0.0
          %477 = vmatprep.subr.mxu0 0.0
          %478 = vmatpush1.msra.mxu0 0.0
          %479 = vmatprep.subr.mxu0 0.0
          %480 = vmatpush1.msra.mxu0 0.0
          %481 = vmatprep.subr.mxu0 0.0
          %482 = vmatpush1.msra.mxu0 0.0
          %483 = vmatprep.subr.mxu0 0.0
          %484 = vmatpush1.msra.mxu0 0.0
          %485 = vmatprep.subr.mxu0 0.0
          %486 = vmatpush1.msra.mxu0 0.0
          %487 = vmatprep.subr.mxu0 0.0
          %488 = vmatpush1.msra.mxu0 0.0
          %489 = vmatprep.subr.mxu0 0.0
          %490 = vmatpush1.msra.mxu0 0.0
          %491 = vmatprep.subr.mxu0 0.0
          %492 = vmatpush1.msra.mxu0 0.0
          %493 = vmatprep.subr.mxu0 0.0
          %494 = vmatpush1.msra.mxu0 0.0
          %495 = vmatprep.subr.mxu0 0.0
          %496 = vmatpush1.msra.mxu0 0.0
          %497 = vmatprep.subr.mxu0 0.0
          %498 = vmatpush1.msra.mxu0 0.0
          %499 = vmatprep.subr.mxu0 0.0
          %500 = vmatpush1.msra.mxu0 0.0
          %501 = vmatprep.subr.mxu0 0.0
          %502 = vmatpush1.msra.mxu0 0.0
          %503 = vmatprep.subr.mxu0 0.0
          %504 = vmatpush1.msra.mxu0 0.0
          %505 = vmatprep.subr.mxu0 0.0
          %506 = vmatpush1.msra.mxu0 0.0
          %507 = vmatprep.subr.mxu0 0.0
          %508 = vmatpush1.msra.mxu0 0.0
          %509 = vmatprep.subr.mxu0 0.0
          %510 = vmatpush1.msra.mxu0 0.0
          %511 = vmatprep.subr.mxu0 0.0
          %512 = vmatpush1.msra.mxu0 0.0
          %513 = vmatprep.subr.mxu0 0.0
          %514 = vmatpush1.msra.mxu0 0.0
          %515 = vmatprep.subr.mxu0 0.0
          %516 = vmatpush1.msra.mxu0 0.0
          %517 = vmatprep.subr.mxu0 0.0
          %518 = vmatpush1.msra.mxu0 0.0
          %519 = vmatprep.subr.mxu0 0.0
          %520 = vmatpush1.msra.mxu0 0.0
          %521 = vmatprep.subr.mxu0 0.0
          %522 = vmatpush1.msra.mxu0 0.0
          %523 = vmatprep.subr.mxu0 0.0
          %524 = vmatpush1.msra.mxu0 0.0
          %525 = vmatprep.subr.mxu0 0.0
          %526 = vmatpush1.msra.mxu0 0.0
          %527 = vmatprep.subr.mxu0 0.0
          %528 = vmatpush1.msra.mxu0 0.0
          %529 = vmatprep.mubr.f32.mxu0 0.0
          %530 = vmatmul.mubr.f32.gmra.mrb[0].mxu0 %v463
          %v531 = vpop.f32.mrb[0].mxu0
          %v532 = vadd.f32 0.0, %v531
          %v533 = vpop.f32.mrb[0].mxu0
          %534 = vdwg.mxu0
          %v535 = vadd.f32 %v456, 1.0
          %v536 = vld [vmem:[%s5 + $0x1] sm:$0x1]
          %v537 = vlaneseq
          %v538 = vshrl.u32 %v537, 7
          %v539 = vsub.s32 0, %v538
          %v540 = vrot.slane %v536, %v539
          %v541 = vadd.f32 %v532, %v540
          %v542 = vmul.f32 %v535, %v541
          %543 = vst.msk [vmem:[#allocation2] sm:$0xff] %vm377, %v542
          %v544 = vld [vmem:[%s5 + $0x2] sm:$0x1]
          %v545 = vlaneseq
          %v546 = vshrl.u32 %v545, 7
          %v547 = vsub.s32 0, %v546
          %v548 = vrot.slane %v544, %v547
          %550 = vrot.lane.b32.xlu0 %v548, 32
          %v551 = vpop.permute.xlu0 %550
          %v553 = vadd.f32 %v532, %v551
          %555 = vrot.lane.b32.xlu0 %v553, 96
          %v556 = vpop.permute.xlu0 %555
          %v558 = vmul.f32 %v535, %v556
          %559 = vst.msk [vmem:[#allocation3] sm:$0xff] %vm377, %v558
          %v560 = vld [vmem:[%s5 + $0x3] sm:$0x1]
          %v561 = vlaneseq
          %v562 = vshrl.u32 %v561, 7
          %v563 = vsub.s32 0, %v562
          %v564 = vrot.slane %v560, %v563
          %566 = vrot.lane.b32.xlu0 %v564, 64
          %v567 = vpop.permute.xlu0 %566
          %v569 = vadd.f32 %v532, %v567
          %571 = vrot.lane.b32.xlu0 %v569, 64
          %v572 = vpop.permute.xlu0 %571
          %574 = vst.msk [vmem:[#allocation4] sm:$0xff] %vm377, %v572
        $region68: #{tpu_custom_call.1} parent=43 // pred_fallthru
          _
        %s575 = smul.u32 %s32, 8
        %s576 = scalar_lea.vmem [#allocation3], %s575
        %v577 = vld [vmem:[%s576] sm:$0xff]
        %v578 = vld [vmem:[#allocation2] sm:$0xff]
        %v579 = vld [vmem:[#allocation4] sm:$0xff]
        %vm580 = vcmask 64512
        %v582 = vsel %vm580, %v577, 0
        %v585 = vsel %vm580, %v578, 0
        %587 = vmatprep.subr.mxu0 0.0
        %588 = vmatpush1.xpose.msra.mxu0 %v585
        %589 = vmatprep.subr.mxu0 0.0
        %590 = vmatpush1.xpose.msra.mxu0 0.0
        %591 = vmatprep.subr.mxu0 0.0
        %592 = vmatpush1.xpose.msra.mxu0 0.0
        %593 = vmatprep.subr.mxu0 0.0
        %594 = vmatpush1.xpose.msra.mxu0 0.0
        %595 = vmatprep.subr.mxu0 0.0
        %596 = vmatpush1.xpose.msra.mxu0 0.0
        %597 = vmatprep.subr.mxu0 0.0
        %598 = vmatpush1.xpose.msra.mxu0 0.0
        %599 = vmatprep.subr.mxu0 0.0
        %600 = vmatpush1.xpose.msra.mxu0 0.0
        %601 = vmatprep.subr.mxu0 0.0
        %602 = vmatpush1.xpose.msra.mxu0 0.0
        %603 = vmatprep.subr.mxu0 0.0
        %604 = vmatpush1.xpose.msra.mxu0 0.0
        %605 = vmatprep.subr.mxu0 0.0
        %606 = vmatpush1.xpose.msra.mxu0 0.0
        %607 = vmatprep.subr.mxu0 0.0
        %608 = vmatpush1.xpose.msra.mxu0 0.0
        %609 = vmatprep.subr.mxu0 0.0
        %610 = vmatpush1.xpose.msra.mxu0 0.0
        %611 = vmatprep.subr.mxu0 0.0
        %612 = vmatpush1.xpose.msra.mxu0 0.0
        %613 = vmatprep.subr.mxu0 0.0
        %614 = vmatpush1.xpose.msra.mxu0 0.0
        %615 = vmatprep.subr.mxu0 0.0
        %616 = vmatpush1.xpose.msra.mxu0 0.0
        %617 = vmatprep.subr.mxu0 0.0
        %618 = vmatpush1.xpose.msra.mxu0 0.0
        %619 = vmatprep.subr.mxu0 0.0
        %620 = vmatpush1.xpose.msra.mxu0 0.0
        %621 = vmatprep.subr.mxu0 0.0
        %622 = vmatpush1.xpose.msra.mxu0 0.0
        %623 = vmatprep.subr.mxu0 0.0
        %624 = vmatpush1.xpose.msra.mxu0 0.0
        %625 = vmatprep.subr.mxu0 0.0
        %626 = vmatpush1.xpose.msra.mxu0 0.0
        %627 = vmatprep.subr.mxu0 0.0
        %628 = vmatpush1.xpose.msra.mxu0 0.0
        %629 = vmatprep.subr.mxu0 0.0
        %630 = vmatpush1.xpose.msra.mxu0 0.0
        %631 = vmatprep.subr.mxu0 0.0
        %632 = vmatpush1.xpose.msra.mxu0 0.0
        %633 = vmatprep.subr.mxu0 0.0
        %634 = vmatpush1.xpose.msra.mxu0 0.0
        %635 = vmatprep.subr.mxu0 0.0
        %636 = vmatpush1.xpose.msra.mxu0 0.0
        %637 = vmatprep.subr.mxu0 0.0
        %638 = vmatpush1.xpose.msra.mxu0 0.0
        %639 = vmatprep.subr.mxu0 0.0
        %640 = vmatpush1.xpose.msra.mxu0 0.0
        %641 = vmatprep.subr.mxu0 0.0
        %642 = vmatpush1.xpose.msra.mxu0 0.0
        %643 = vmatprep.subr.mxu0 0.0
        %644 = vmatpush1.xpose.msra.mxu0 0.0
        %645 = vmatprep.subr.mxu0 0.0
        %646 = vmatpush1.xpose.msra.mxu0 0.0
        %647 = vmatprep.subr.mxu0 0.0
        %648 = vmatpush1.xpose.msra.mxu0 0.0
        %649 = vmatprep.subr.mxu0 0.0
        %650 = vmatpush1.xpose.msra.mxu0 0.0
        %651 = vmatprep.mubr.f32.mxu0 0.0
        %652 = vmatmul.mubr.f32.gmra.mrb[0].mxu0 %v582
        %v653 = vpop.f32.mrb[0].mxu0
        %v654 = vadd.f32 0.0, %v653
        %v655 = vpop.f32.mrb[0].mxu0
        %656 = vdwg.mxu0
        %v657 = vsel %vm580, %v654, -inf
        %658 = vmax.xlane.f32.xlu0 %v657
        %v659 = vpop.xlane.xlu0 %658
        %v660 = vsub.f32 %v654, %v659
        %v661 = vmul.f32 %v660, 1.442695
        %v662 = vpow.pop %v661
        %v663 = vsel %vm580, %v662, 0.0
        %664 = vadd.xlane.f32.xlu0 %v663
        %v665 = vpop.xlane.xlu0 %664
        %v667 = vsel %vm580, %v662, 0
        %669 = vmatprep.subr.mxu0 0.0
        %670 = vmatpush1.msra.mxu0 %v579
        %671 = vmatprep.subr.mxu0 0.0
        %672 = vmatpush1.msra.mxu0 0.0
        %673 = vmatprep.subr.mxu0 0.0
        %674 = vmatpush1.msra.mxu0 0.0
        %675 = vmatprep.subr.mxu0 0.0
        %676 = vmatpush1.msra.mxu0 0.0
        %677 = vmatprep.subr.mxu0 0.0
        %678 = vmatpush1.msra.mxu0 0.0
        %679 = vmatprep.subr.mxu0 0.0
        %680 = vmatpush1.msra.mxu0 0.0
        %681 = vmatprep.subr.mxu0 0.0
        %682 = vmatpush1.msra.mxu0 0.0
        %683 = vmatprep.subr.mxu0 0.0
        %684 = vmatpush1.msra.mxu0 0.0
        %685 = vmatprep.subr.mxu0 0.0
        %686 = vmatpush1.msra.mxu0 0.0
        %687 = vmatprep.subr.mxu0 0.0
        %688 = vmatpush1.msra.mxu0 0.0
        %689 = vmatprep.subr.mxu0 0.0
        %690 = vmatpush1.msra.mxu0 0.0
        %691 = vmatprep.subr.mxu0 0.0
        %692 = vmatpush1.msra.mxu0 0.0
        %693 = vmatprep.subr.mxu0 0.0
        %694 = vmatpush1.msra.mxu0 0.0
        %695 = vmatprep.subr.mxu0 0.0
        %696 = vmatpush1.msra.mxu0 0.0
        %697 = vmatprep.subr.mxu0 0.0
        %698 = vmatpush1.msra.mxu0 0.0
        %699 = vmatprep.subr.mxu0 0.0
        %700 = vmatpush1.msra.mxu0 0.0
        %701 = vmatprep.subr.mxu0 0.0
        %702 = vmatpush1.msra.mxu0 0.0
        %703 = vmatprep.subr.mxu0 0.0
        %704 = vmatpush1.msra.mxu0 0.0
        %705 = vmatprep.subr.mxu0 0.0
        %706 = vmatpush1.msra.mxu0 0.0
        %707 = vmatprep.subr.mxu0 0.0
        %708 = vmatpush1.msra.mxu0 0.0
        %709 = vmatprep.subr.mxu0 0.0
        %710 = vmatpush1.msra.mxu0 0.0
        %711 = vmatprep.subr.mxu0 0.0
        %712 = vmatpush1.msra.mxu0 0.0
        %713 = vmatprep.subr.mxu0 0.0
        %714 = vmatpush1.msra.mxu0 0.0
        %715 = vmatprep.subr.mxu0 0.0
        %716 = vmatpush1.msra.mxu0 0.0
        %717 = vmatprep.subr.mxu0 0.0
        %718 = vmatpush1.msra.mxu0 0.0
        %719 = vmatprep.subr.mxu0 0.0
        %720 = vmatpush1.msra.mxu0 0.0
        %721 = vmatprep.subr.mxu0 0.0
        %722 = vmatpush1.msra.mxu0 0.0
        %723 = vmatprep.subr.mxu0 0.0
        %724 = vmatpush1.msra.mxu0 0.0
        %725 = vmatprep.subr.mxu0 0.0
        %726 = vmatpush1.msra.mxu0 0.0
        %727 = vmatprep.subr.mxu0 0.0
        %728 = vmatpush1.msra.mxu0 0.0
        %729 = vmatprep.subr.mxu0 0.0
        %730 = vmatpush1.msra.mxu0 0.0
        %731 = vmatprep.subr.mxu0 0.0
        %732 = vmatpush1.msra.mxu0 0.0
        %733 = vmatprep.mubr.f32.mxu0 0.0
        %734 = vmatmul.mubr.f32.gmra.mrb[0].mxu0 %v667
        %v735 = vpop.f32.mrb[0].mxu0
        %v736 = vadd.f32 0.0, %v735
        %v737 = vpop.f32.mrb[0].mxu0
        %738 = vdwg.mxu0
        %v739 = vrcp.pop %v665
        %v740 = vmul.f32 %v736, %v739
        %741 = vst.msk [vmem:[#allocation5] sm:$0xff] %vm580, %v740
        %v742 = vld [vmem:[#allocation2] sm:$0xff]
        %v743 = vld [vmem:[#allocation4] sm:$0xff]
        %744 = vrot.lane.b32.xlu0 %v577, 120
        %v745 = vpop.permute.xlu0 %744
        %747 = vrot.lane.b32.xlu0 %v742, 120
        %v748 = vpop.permute.xlu0 %747
        %v749 = vsel %vm580, %v745, 0
        %v751 = vsel %vm580, %v748, 0
        %753 = vmatprep.subr.mxu0 0.0
        %754 = vmatpush1.xpose.msra.mxu0 %v751
        %755 = vmatprep.subr.mxu0 0.0
        %756 = vmatpush1.xpose.msra.mxu0 0.0
        %757 = vmatprep.subr.mxu0 0.0
        %758 = vmatpush1.xpose.msra.mxu0 0.0
        %759 = vmatprep.subr.mxu0 0.0
        %760 = vmatpush1.xpose.msra.mxu0 0.0
        %761 = vmatprep.subr.mxu0 0.0
        %762 = vmatpush1.xpose.msra.mxu0 0.0
        %763 = vmatprep.subr.mxu0 0.0
        %764 = vmatpush1.xpose.msra.mxu0 0.0
        %765 = vmatprep.subr.mxu0 0.0
        %766 = vmatpush1.xpose.msra.mxu0 0.0
        %767 = vmatprep.subr.mxu0 0.0
        %768 = vmatpush1.xpose.msra.mxu0 0.0
        %769 = vmatprep.subr.mxu0 0.0
        %770 = vmatpush1.xpose.msra.mxu0 0.0
        %771 = vmatprep.subr.mxu0 0.0
        %772 = vmatpush1.xpose.msra.mxu0 0.0
        %773 = vmatprep.subr.mxu0 0.0
        %774 = vmatpush1.xpose.msra.mxu0 0.0
        %775 = vmatprep.subr.mxu0 0.0
        %776 = vmatpush1.xpose.msra.mxu0 0.0
        %777 = vmatprep.subr.mxu0 0.0
        %778 = vmatpush1.xpose.msra.mxu0 0.0
        %779 = vmatprep.subr.mxu0 0.0
        %780 = vmatpush1.xpose.msra.mxu0 0.0
        %781 = vmatprep.subr.mxu0 0.0
        %782 = vmatpush1.xpose.msra.mxu0 0.0
        %783 = vmatprep.subr.mxu0 0.0
        %784 = vmatpush1.xpose.msra.mxu0 0.0
        %785 = vmatprep.subr.mxu0 0.0
        %786 = vmatpush1.xpose.msra.mxu0 0.0
        %787 = vmatprep.subr.mxu0 0.0
        %788 = vmatpush1.xpose.msra.mxu0 0.0
        %789 = vmatprep.subr.mxu0 0.0
        %790 = vmatpush1.xpose.msra.mxu0 0.0
        %791 = vmatprep.subr.mxu0 0.0
        %792 = vmatpush1.xpose.msra.mxu0 0.0
        %793 = vmatprep.subr.mxu0 0.0
        %794 = vmatpush1.xpose.msra.mxu0 0.0
        %795 = vmatprep.subr.mxu0 0.0
        %796 = vmatpush1.xpose.msra.mxu0 0.0
        %797 = vmatprep.subr.mxu0 0.0
        %798 = vmatpush1.xpose.msra.mxu0 0.0
        %799 = vmatprep.subr.mxu0 0.0
        %800 = vmatpush1.xpose.msra.mxu0 0.0
        %801 = vmatprep.subr.mxu0 0.0
        %802 = vmatpush1.xpose.msra.mxu0 0.0
        %803 = vmatprep.subr.mxu0 0.0
        %804 = vmatpush1.xpose.msra.mxu0 0.0
        %805 = vmatprep.subr.mxu0 0.0
        %806 = vmatpush1.xpose.msra.mxu0 0.0
        %807 = vmatprep.subr.mxu0 0.0
        %808 = vmatpush1.xpose.msra.mxu0 0.0
        %809 = vmatprep.subr.mxu0 0.0
        %810 = vmatpush1.xpose.msra.mxu0 0.0
        %811 = vmatprep.subr.mxu0 0.0
        %812 = vmatpush1.xpose.msra.mxu0 0.0
        %813 = vmatprep.subr.mxu0 0.0
        %814 = vmatpush1.xpose.msra.mxu0 0.0
        %815 = vmatprep.subr.mxu0 0.0
        %816 = vmatpush1.xpose.msra.mxu0 0.0
        %817 = vmatprep.mubr.f32.mxu0 0.0
        %818 = vmatmul.mubr.f32.gmra.mrb[0].mxu0 %v749
        %v819 = vpop.f32.mrb[0].mxu0
        %v820 = vadd.f32 0.0, %v819
        %v821 = vpop.f32.mrb[0].mxu0
        %822 = vdwg.mxu0
        %v823 = vsel %vm580, %v820, -inf
        %824 = vmax.xlane.f32.xlu0 %v823
        %v825 = vpop.xlane.xlu0 %824
        %v826 = vsub.f32 %v820, %v825
        %v827 = vmul.f32 %v826, 1.442695
        %v828 = vpow.pop %v827
        %v829 = vsel %vm580, %v828, 0.0
        %830 = vadd.xlane.f32.xlu0 %v829
        %v831 = vpop.xlane.xlu0 %830
        %833 = vrot.lane.b32.xlu0 %v743, 120
        %v834 = vpop.permute.xlu0 %833
        %v837 = vsel %vm580, %v828, 0
        %839 = vmatprep.subr.mxu0 0.0
        %840 = vmatpush1.msra.mxu0 %v834
        %841 = vmatprep.subr.mxu0 0.0
        %842 = vmatpush1.msra.mxu0 0.0
        %843 = vmatprep.subr.mxu0 0.0
        %844 = vmatpush1.msra.mxu0 0.0
        %845 = vmatprep.subr.mxu0 0.0
        %846 = vmatpush1.msra.mxu0 0.0
        %847 = vmatprep.subr.mxu0 0.0
        %848 = vmatpush1.msra.mxu0 0.0
        %849 = vmatprep.subr.mxu0 0.0
        %850 = vmatpush1.msra.mxu0 0.0
        %851 = vmatprep.subr.mxu0 0.0
        %852 = vmatpush1.msra.mxu0 0.0
        %853 = vmatprep.subr.mxu0 0.0
        %854 = vmatpush1.msra.mxu0 0.0
        %855 = vmatprep.subr.mxu0 0.0
        %856 = vmatpush1.msra.mxu0 0.0
        %857 = vmatprep.subr.mxu0 0.0
        %858 = vmatpush1.msra.mxu0 0.0
        %859 = vmatprep.subr.mxu0 0.0
        %860 = vmatpush1.msra.mxu0 0.0
        %861 = vmatprep.subr.mxu0 0.0
        %862 = vmatpush1.msra.mxu0 0.0
        %863 = vmatprep.subr.mxu0 0.0
        %864 = vmatpush1.msra.mxu0 0.0
        %865 = vmatprep.subr.mxu0 0.0
        %866 = vmatpush1.msra.mxu0 0.0
        %867 = vmatprep.subr.mxu0 0.0
        %868 = vmatpush1.msra.mxu0 0.0
        %869 = vmatprep.subr.mxu0 0.0
        %870 = vmatpush1.msra.mxu0 0.0
        %871 = vmatprep.subr.mxu0 0.0
        %872 = vmatpush1.msra.mxu0 0.0
        %873 = vmatprep.subr.mxu0 0.0
        %874 = vmatpush1.msra.mxu0 0.0
        %875 = vmatprep.subr.mxu0 0.0
        %876 = vmatpush1.msra.mxu0 0.0
        %877 = vmatprep.subr.mxu0 0.0
        %878 = vmatpush1.msra.mxu0 0.0
        %879 = vmatprep.subr.mxu0 0.0
        %880 = vmatpush1.msra.mxu0 0.0
        %881 = vmatprep.subr.mxu0 0.0
        %882 = vmatpush1.msra.mxu0 0.0
        %883 = vmatprep.subr.mxu0 0.0
        %884 = vmatpush1.msra.mxu0 0.0
        %885 = vmatprep.subr.mxu0 0.0
        %886 = vmatpush1.msra.mxu0 0.0
        %887 = vmatprep.subr.mxu0 0.0
        %888 = vmatpush1.msra.mxu0 0.0
        %889 = vmatprep.subr.mxu0 0.0
        %890 = vmatpush1.msra.mxu0 0.0
        %891 = vmatprep.subr.mxu0 0.0
        %892 = vmatpush1.msra.mxu0 0.0
        %893 = vmatprep.subr.mxu0 0.0
        %894 = vmatpush1.msra.mxu0 0.0
        %895 = vmatprep.subr.mxu0 0.0
        %896 = vmatpush1.msra.mxu0 0.0
        %897 = vmatprep.subr.mxu0 0.0
        %898 = vmatpush1.msra.mxu0 0.0
        %899 = vmatprep.subr.mxu0 0.0
        %900 = vmatpush1.msra.mxu0 0.0
        %901 = vmatprep.subr.mxu0 0.0
        %902 = vmatpush1.msra.mxu0 0.0
        %903 = vmatprep.mubr.f32.mxu0 0.0
        %904 = vmatmul.mubr.f32.gmra.mrb[0].mxu0 %v837
        %v905 = vpop.f32.mrb[0].mxu0
        %v906 = vadd.f32 0.0, %v905
        %v907 = vpop.f32.mrb[0].mxu0
        %908 = vdwg.mxu0
        %v909 = vrcp.pop %v831
        %v910 = vmul.f32 %v906, %v909
        %912 = vrot.lane.b32.xlu0 %v910, 8
        %v913 = vpop.permute.xlu0 %912
        %vm915 = vcmask 130112
        %916 = vst.msk [vmem:[#allocation5] sm:$0xff] %vm915, %v913
        %v917 = vld [vmem:[#allocation2] sm:$0xff]
        %v918 = vld [vmem:[#allocation4] sm:$0xff]
        %919 = vrot.lane.b32.xlu0 %v577, 112
        %v920 = vpop.permute.xlu0 %919
        %922 = vrot.lane.b32.xlu0 %v917, 112
        %v923 = vpop.permute.xlu0 %922
        %v924 = vsel %vm580, %v920, 0
        %v926 = vsel %vm580, %v923, 0
        %928 = vmatprep.subr.mxu0 0.0
        %929 = vmatpush1.xpose.msra.mxu0 %v926
        %930 = vmatprep.subr.mxu0 0.0
        %931 = vmatpush1.xpose.msra.mxu0 0.0
        %932 = vmatprep.subr.mxu0 0.0
        %933 = vmatpush1.xpose.msra.mxu0 0.0
        %934 = vmatprep.subr.mxu0 0.0
        %935 = vmatpush1.xpose.msra.mxu0 0.0
        %936 = vmatprep.subr.mxu0 0.0
        %937 = vmatpush1.xpose.msra.mxu0 0.0
        %938 = vmatprep.subr.mxu0 0.0
        %939 = vmatpush1.xpose.msra.mxu0 0.0
        %940 = vmatprep.subr.mxu0 0.0
        %941 = vmatpush1.xpose.msra.mxu0 0.0
        %942 = vmatprep.subr.mxu0 0.0
        %943 = vmatpush1.xpose.msra.mxu0 0.0
        %944 = vmatprep.subr.mxu0 0.0
        %945 = vmatpush1.xpose.msra.mxu0 0.0
        %946 = vmatprep.subr.mxu0 0.0
        %947 = vmatpush1.xpose.msra.mxu0 0.0
        %948 = vmatprep.subr.mxu0 0.0
        %949 = vmatpush1.xpose.msra.mxu0 0.0
        %950 = vmatprep.subr.mxu0 0.0
        %951 = vmatpush1.xpose.msra.mxu0 0.0
        %952 = vmatprep.subr.mxu0 0.0
        %953 = vmatpush1.xpose.msra.mxu0 0.0
        %954 = vmatprep.subr.mxu0 0.0
        %955 = vmatpush1.xpose.msra.mxu0 0.0
        %956 = vmatprep.subr.mxu0 0.0
        %957 = vmatpush1.xpose.msra.mxu0 0.0
        %958 = vmatprep.subr.mxu0 0.0
        %959 = vmatpush1.xpose.msra.mxu0 0.0
        %960 = vmatprep.subr.mxu0 0.0
        %961 = vmatpush1.xpose.msra.mxu0 0.0
        %962 = vmatprep.subr.mxu0 0.0
        %963 = vmatpush1.xpose.msra.mxu0 0.0
        %964 = vmatprep.subr.mxu0 0.0
        %965 = vmatpush1.xpose.msra.mxu0 0.0
        %966 = vmatprep.subr.mxu0 0.0
        %967 = vmatpush1.xpose.msra.mxu0 0.0
        %968 = vmatprep.subr.mxu0 0.0
        %969 = vmatpush1.xpose.msra.mxu0 0.0
        %970 = vmatprep.subr.mxu0 0.0
        %971 = vmatpush1.xpose.msra.mxu0 0.0
        %972 = vmatprep.subr.mxu0 0.0
        %973 = vmatpush1.xpose.msra.mxu0 0.0
        %974 = vmatprep.subr.mxu0 0.0
        %975 = vmatpush1.xpose.msra.mxu0 0.0
        %976 = vmatprep.subr.mxu0 0.0
        %977 = vmatpush1.xpose.msra.mxu0 0.0
        %978 = vmatprep.subr.mxu0 0.0
        %979 = vmatpush1.xpose.msra.mxu0 0.0
        %980 = vmatprep.subr.mxu0 0.0
        %981 = vmatpush1.xpose.msra.mxu0 0.0
        %982 = vmatprep.subr.mxu0 0.0
        %983 = vmatpush1.xpose.msra.mxu0 0.0
        %984 = vmatprep.subr.mxu0 0.0
        %985 = vmatpush1.xpose.msra.mxu0 0.0
        %986 = vmatprep.subr.mxu0 0.0
        %987 = vmatpush1.xpose.msra.mxu0 0.0
        %988 = vmatprep.subr.mxu0 0.0
        %989 = vmatpush1.xpose.msra.mxu0 0.0
        %990 = vmatprep.subr.mxu0 0.0
        %991 = vmatpush1.xpose.msra.mxu0 0.0
        %992 = vmatprep.mubr.f32.mxu0 0.0
        %993 = vmatmul.mubr.f32.gmra.mrb[0].mxu0 %v924
        %v994 = vpop.f32.mrb[0].mxu0
        %v995 = vadd.f32 0.0, %v994
        %v996 = vpop.f32.mrb[0].mxu0
        %997 = vdwg.mxu0
        %v998 = vsel %vm580, %v995, -inf
        %999 = vmax.xlane.f32.xlu0 %v998
        %v1000 = vpop.xlane.xlu0 %999
        %v1001 = vsub.f32 %v995, %v1000
        %v1002 = vmul.f32 %v1001, 1.442695
        %v1003 = vpow.pop %v1002
        %v1004 = vsel %vm580, %v1003, 0.0
        %1005 = vadd.xlane.f32.xlu0 %v1004
        %v1006 = vpop.xlane.xlu0 %1005
        %1008 = vrot.lane.b32.xlu0 %v918, 112
        %v1009 = vpop.permute.xlu0 %1008
        %v1012 = vsel %vm580, %v1003, 0
        %1014 = vmatprep.subr.mxu0 0.0
        %1015 = vmatpush1.msra.mxu0 %v1009
        %1016 = vmatprep.subr.mxu0 0.0
        %1017 = vmatpush1.msra.mxu0 0.0
        %1018 = vmatprep.subr.mxu0 0.0
        %1019 = vmatpush1.msra.mxu0 0.0
        %1020 = vmatprep.subr.mxu0 0.0
        %1021 = vmatpush1.msra.mxu0 0.0
        %1022 = vmatprep.subr.mxu0 0.0
        %1023 = vmatpush1.msra.mxu0 0.0
        %1024 = vmatprep.subr.mxu0 0.0
        %1025 = vmatpush1.msra.mxu0 0.0
        %1026 = vmatprep.subr.mxu0 0.0
        %1027 = vmatpush1.msra.mxu0 0.0
        %1028 = vmatprep.subr.mxu0 0.0
        %1029 = vmatpush1.msra.mxu0 0.0
        %1030 = vmatprep.subr.mxu0 0.0
        %1031 = vmatpush1.msra.mxu0 0.0
        %1032 = vmatprep.subr.mxu0 0.0
        %1033 = vmatpush1.msra.mxu0 0.0
        %1034 = vmatprep.subr.mxu0 0.0
        %1035 = vmatpush1.msra.mxu0 0.0
        %1036 = vmatprep.subr.mxu0 0.0
        %1037 = vmatpush1.msra.mxu0 0.0
        %1038 = vmatprep.subr.mxu0 0.0
        %1039 = vmatpush1.msra.mxu0 0.0
        %1040 = vmatprep.subr.mxu0 0.0
        %1041 = vmatpush1.msra.mxu0 0.0
        %1042 = vmatprep.subr.mxu0 0.0
        %1043 = vmatpush1.msra.mxu0 0.0
        %1044 = vmatprep.subr.mxu0 0.0
        %1045 = vmatpush1.msra.mxu0 0.0
        %1046 = vmatprep.subr.mxu0 0.0
        %1047 = vmatpush1.msra.mxu0 0.0
        %1048 = vmatprep.subr.mxu0 0.0
        %1049 = vmatpush1.msra.mxu0 0.0
        %1050 = vmatprep.subr.mxu0 0.0
        %1051 = vmatpush1.msra.mxu0 0.0
        %1052 = vmatprep.subr.mxu0 0.0
        %1053 = vmatpush1.msra.mxu0 0.0
        %1054 = vmatprep.subr.mxu0 0.0
        %1055 = vmatpush1.msra.mxu0 0.0
        %1056 = vmatprep.subr.mxu0 0.0
        %1057 = vmatpush1.msra.mxu0 0.0
        %1058 = vmatprep.subr.mxu0 0.0
        %1059 = vmatpush1.msra.mxu0 0.0
        %1060 = vmatprep.subr.mxu0 0.0
        %1061 = vmatpush1.msra.mxu0 0.0
        %1062 = vmatprep.subr.mxu0 0.0
        %1063 = vmatpush1.msra.mxu0 0.0
        %1064 = vmatprep.subr.mxu0 0.0
        %1065 = vmatpush1.msra.mxu0 0.0
        %1066 = vmatprep.subr.mxu0 0.0
        %1067 = vmatpush1.msra.mxu0 0.0
        %1068 = vmatprep.subr.mxu0 0.0
        %1069 = vmatpush1.msra.mxu0 0.0
        %1070 = vmatprep.subr.mxu0 0.0
        %1071 = vmatpush1.msra.mxu0 0.0
        %1072 = vmatprep.subr.mxu0 0.0
        %1073 = vmatpush1.msra.mxu0 0.0
        %1074 = vmatprep.subr.mxu0 0.0
        %1075 = vmatpush1.msra.mxu0 0.0
        %1076 = vmatprep.subr.mxu0 0.0
        %1077 = vmatpush1.msra.mxu0 0.0
        %1078 = vmatprep.mubr.f32.mxu0 0.0
        %1079 = vmatmul.mubr.f32.gmra.mrb[0].mxu0 %v1012
        %v1080 = vpop.f32.mrb[0].mxu0
        %v1081 = vadd.f32 0.0, %v1080
        %v1082 = vpop.f32.mrb[0].mxu0
        %1083 = vdwg.mxu0
        %v1084 = vrcp.pop %v1006
        %v1085 = vmul.f32 %v1081, %v1084
        %1087 = vrot.lane.b32.xlu0 %v1085, 16
        %v1088 = vpop.permute.xlu0 %1087
        %vm1090 = vcmask 195712
        %1091 = vst.msk [vmem:[#allocation5] sm:$0xff] %vm1090, %v1088
        %v1092 = vld [vmem:[#allocation2] sm:$0xff]
        %v1093 = vld [vmem:[#allocation4] sm:$0xff]
        %1094 = vrot.lane.b32.xlu0 %v577, 104
        %v1095 = vpop.permute.xlu0 %1094
        %1097 = vrot.lane.b32.xlu0 %v1092, 104
        %v1098 = vpop.permute.xlu0 %1097
        %v1099 = vsel %vm580, %v1095, 0
        %v1101 = vsel %vm580, %v1098, 0
        %1103 = vmatprep.subr.mxu0 0.0
        %1104 = vmatpush1.xpose.msra.mxu0 %v1101
        %1105 = vmatprep.subr.mxu0 0.0
        %1106 = vmatpush1.xpose.msra.mxu0 0.0
        %1107 = vmatprep.subr.mxu0 0.0
        %1108 = vmatpush1.xpose.msra.mxu0 0.0
        %1109 = vmatprep.subr.mxu0 0.0
        %1110 = vmatpush1.xpose.msra.mxu0 0.0
        %1111 = vmatprep.subr.mxu0 0.0
        %1112 = vmatpush1.xpose.msra.mxu0 0.0
        %1113 = vmatprep.subr.mxu0 0.0
        %1114 = vmatpush1.xpose.msra.mxu0 0.0
        %1115 = vmatprep.subr.mxu0 0.0
        %1116 = vmatpush1.xpose.msra.mxu0 0.0
        %1117 = vmatprep.subr.mxu0 0.0
        %1118 = vmatpush1.xpose.msra.mxu0 0.0
        %1119 = vmatprep.subr.mxu0 0.0
        %1120 = vmatpush1.xpose.msra.mxu0 0.0
        %1121 = vmatprep.subr.mxu0 0.0
        %1122 = vmatpush1.xpose.msra.mxu0 0.0
        %1123 = vmatprep.subr.mxu0 0.0
        %1124 = vmatpush1.xpose.msra.mxu0 0.0
        %1125 = vmatprep.subr.mxu0 0.0
        %1126 = vmatpush1.xpose.msra.mxu0 0.0
        %1127 = vmatprep.subr.mxu0 0.0
        %1128 = vmatpush1.xpose.msra.mxu0 0.0
        %1129 = vmatprep.subr.mxu0 0.0
        %1130 = vmatpush1.xpose.msra.mxu0 0.0
        %1131 = vmatprep.subr.mxu0 0.0
        %1132 = vmatpush1.xpose.msra.mxu0 0.0
        %1133 = vmatprep.subr.mxu0 0.0
        %1134 = vmatpush1.xpose.msra.mxu0 0.0
        %1135 = vmatprep.subr.mxu0 0.0
        %1136 = vmatpush1.xpose.msra.mxu0 0.0
        %1137 = vmatprep.subr.mxu0 0.0
        %1138 = vmatpush1.xpose.msra.mxu0 0.0
        %1139 = vmatprep.subr.mxu0 0.0
        %1140 = vmatpush1.xpose.msra.mxu0 0.0
        %1141 = vmatprep.subr.mxu0 0.0
        %1142 = vmatpush1.xpose.msra.mxu0 0.0
        %1143 = vmatprep.subr.mxu0 0.0
        %1144 = vmatpush1.xpose.msra.mxu0 0.0
        %1145 = vmatprep.subr.mxu0 0.0
        %1146 = vmatpush1.xpose.msra.mxu0 0.0
        %1147 = vmatprep.subr.mxu0 0.0
        %1148 = vmatpush1.xpose.msra.mxu0 0.0
        %1149 = vmatprep.subr.mxu0 0.0
        %1150 = vmatpush1.xpose.msra.mxu0 0.0
        %1151 = vmatprep.subr.mxu0 0.0
        %1152 = vmatpush1.xpose.msra.mxu0 0.0
        %1153 = vmatprep.subr.mxu0 0.0
        %1154 = vmatpush1.xpose.msra.mxu0 0.0
        %1155 = vmatprep.subr.mxu0 0.0
        %1156 = vmatpush1.xpose.msra.mxu0 0.0
        %1157 = vmatprep.subr.mxu0 0.0
        %1158 = vmatpush1.xpose.msra.mxu0 0.0
        %1159 = vmatprep.subr.mxu0 0.0
        %1160 = vmatpush1.xpose.msra.mxu0 0.0
        %1161 = vmatprep.subr.mxu0 0.0
        %1162 = vmatpush1.xpose.msra.mxu0 0.0
        %1163 = vmatprep.subr.mxu0 0.0
        %1164 = vmatpush1.xpose.msra.mxu0 0.0
        %1165 = vmatprep.subr.mxu0 0.0
        %1166 = vmatpush1.xpose.msra.mxu0 0.0
        %1167 = vmatprep.mubr.f32.mxu0 0.0
        %1168 = vmatmul.mubr.f32.gmra.mrb[0].mxu0 %v1099
        %v1169 = vpop.f32.mrb[0].mxu0
        %v1170 = vadd.f32 0.0, %v1169
        %v1171 = vpop.f32.mrb[0].mxu0
        %1172 = vdwg.mxu0
        %v1173 = vsel %vm580, %v1170, -inf
        %1174 = vmax.xlane.f32.xlu0 %v1173
        %v1175 = vpop.xlane.xlu0 %1174
        %v1176 = vsub.f32 %v1170, %v1175
        %v1177 = vmul.f32 %v1176, 1.442695
        %v1178 = vpow.pop %v1177
        %v1179 = vsel %vm580, %v1178, 0.0
        %1180 = vadd.xlane.f32.xlu0 %v1179
        %v1181 = vpop.xlane.xlu0 %1180
        %1183 = vrot.lane.b32.xlu0 %v1093, 104
        %v1184 = vpop.permute.xlu0 %1183
        %v1187 = vsel %vm580, %v1178, 0
        %1189 = vmatprep.subr.mxu0 0.0
        %1190 = vmatpush1.msra.mxu0 %v1184
        %1191 = vmatprep.subr.mxu0 0.0
        %1192 = vmatpush1.msra.mxu0 0.0
        %1193 = vmatprep.subr.mxu0 0.0
        %1194 = vmatpush1.msra.mxu0 0.0
        %1195 = vmatprep.subr.mxu0 0.0
        %1196 = vmatpush1.msra.mxu0 0.0
        %1197 = vmatprep.subr.mxu0 0.0
        %1198 = vmatpush1.msra.mxu0 0.0
        %1199 = vmatprep.subr.mxu0 0.0
        %1200 = vmatpush1.msra.mxu0 0.0
        %1201 = vmatprep.subr.mxu0 0.0
        %1202 = vmatpush1.msra.mxu0 0.0
        %1203 = vmatprep.subr.mxu0 0.0
        %1204 = vmatpush1.msra.mxu0 0.0
        %1205 = vmatprep.subr.mxu0 0.0
        %1206 = vmatpush1.msra.mxu0 0.0
        %1207 = vmatprep.subr.mxu0 0.0
        %1208 = vmatpush1.msra.mxu0 0.0
        %1209 = vmatprep.subr.mxu0 0.0
        %1210 = vmatpush1.msra.mxu0 0.0
        %1211 = vmatprep.subr.mxu0 0.0
        %1212 = vmatpush1.msra.mxu0 0.0
        %1213 = vmatprep.subr.mxu0 0.0
        %1214 = vmatpush1.msra.mxu0 0.0
        %1215 = vmatprep.subr.mxu0 0.0
        %1216 = vmatpush1.msra.mxu0 0.0
        %1217 = vmatprep.subr.mxu0 0.0
        %1218 = vmatpush1.msra.mxu0 0.0
        %1219 = vmatprep.subr.mxu0 0.0
        %1220 = vmatpush1.msra.mxu0 0.0
        %1221 = vmatprep.subr.mxu0 0.0
        %1222 = vmatpush1.msra.mxu0 0.0
        %1223 = vmatprep.subr.mxu0 0.0
        %1224 = vmatpush1.msra.mxu0 0.0
        %1225 = vmatprep.subr.mxu0 0.0
        %1226 = vmatpush1.msra.mxu0 0.0
        %1227 = vmatprep.subr.mxu0 0.0
        %1228 = vmatpush1.msra.mxu0 0.0
        %1229 = vmatprep.subr.mxu0 0.0
        %1230 = vmatpush1.msra.mxu0 0.0
        %1231 = vmatprep.subr.mxu0 0.0
        %1232 = vmatpush1.msra.mxu0 0.0
        %1233 = vmatprep.subr.mxu0 0.0
        %1234 = vmatpush1.msra.mxu0 0.0
        %1235 = vmatprep.subr.mxu0 0.0
        %1236 = vmatpush1.msra.mxu0 0.0
        %1237 = vmatprep.subr.mxu0 0.0
        %1238 = vmatpush1.msra.mxu0 0.0
        %1239 = vmatprep.subr.mxu0 0.0
        %1240 = vmatpush1.msra.mxu0 0.0
        %1241 = vmatprep.subr.mxu0 0.0
        %1242 = vmatpush1.msra.mxu0 0.0
        %1243 = vmatprep.subr.mxu0 0.0
        %1244 = vmatpush1.msra.mxu0 0.0
        %1245 = vmatprep.subr.mxu0 0.0
        %1246 = vmatpush1.msra.mxu0 0.0
        %1247 = vmatprep.subr.mxu0 0.0
        %1248 = vmatpush1.msra.mxu0 0.0
        %1249 = vmatprep.subr.mxu0 0.0
        %1250 = vmatpush1.msra.mxu0 0.0
        %1251 = vmatprep.subr.mxu0 0.0
        %1252 = vmatpush1.msra.mxu0 0.0
        %1253 = vmatprep.mubr.f32.mxu0 0.0
        %1254 = vmatmul.mubr.f32.gmra.mrb[0].mxu0 %v1187
        %v1255 = vpop.f32.mrb[0].mxu0
        %v1256 = vadd.f32 0.0, %v1255
        %v1257 = vpop.f32.mrb[0].mxu0
        %1258 = vdwg.mxu0
        %v1259 = vrcp.pop %v1181
        %v1260 = vmul.f32 %v1256, %v1259
        %1262 = vrot.lane.b32.xlu0 %v1260, 24
        %v1263 = vpop.permute.xlu0 %1262
        %vm1265 = vcmask 261312
        %1266 = vst.msk [vmem:[#allocation5] sm:$0xff] %vm1265, %v1263
        %s1267 = scalar_lea.vmem %s306, %s575 [#allocation6]
        %v1268 = vld [vmem:[%s1267] sm:$0xff]
        %v1269 = vld [vmem:[#allocation5] sm:$0xff]
        %v1270 = vadd.f32 %v1268, %v1269
        %v1271 = vld [vmem:[#allocation14] sm:$0xff]
        %v1272 = vld [vmem:[#allocation14 + $0x8] sm:$0xff]
        %v1273 = vld [vmem:[#allocation14 + $0x10] sm:$0xff]
        %v1274 = vld [vmem:[#allocation14 + $0x18] sm:$0xff]
        %v1275 = vld [vmem:[%s5 + $0x4] sm:$0x1]
        %v1276 = vlaneseq
        %v1277 = vshrl.u32 %v1276, 7
        %v1278 = vsub.s32 0, %v1277
        %v1279 = vrot.slane %v1275, %v1278
        %vm1280 = vcmask 261120
        %v1282 = vsel %vm1280, %v1270, 0
        %1284 = vmatprep.subr.mxu0 0.0
        %1285 = vmatpush1.msra.mxu0 %v1271
        %1286 = vmatprep.subr.mxu0 0.0
        %1287 = vmatpush1.msra.mxu0 %v1272
        %1288 = vmatprep.subr.mxu0 0.0
        %1289 = vmatpush1.msra.mxu0 %v1273
        %1290 = vmatprep.subr.mxu0 0.0
        %1291 = vmatpush1.msra.mxu0 %v1274
        %1292 = vmatprep.subr.mxu0 0.0
        %1293 = vmatpush1.msra.mxu0 0.0
        %1294 = vmatprep.subr.mxu0 0.0
        %1295 = vmatpush1.msra.mxu0 0.0
        %1296 = vmatprep.subr.mxu0 0.0
        %1297 = vmatpush1.msra.mxu0 0.0
        %1298 = vmatprep.subr.mxu0 0.0
        %1299 = vmatpush1.msra.mxu0 0.0
        %1300 = vmatprep.subr.mxu0 0.0
        %1301 = vmatpush1.msra.mxu0 0.0
        %1302 = vmatprep.subr.mxu0 0.0
        %1303 = vmatpush1.msra.mxu0 0.0
        %1304 = vmatprep.subr.mxu0 0.0
        %1305 = vmatpush1.msra.mxu0 0.0
        %1306 = vmatprep.subr.mxu0 0.0
        %1307 = vmatpush1.msra.mxu0 0.0
        %1308 = vmatprep.subr.mxu0 0.0
        %1309 = vmatpush1.msra.mxu0 0.0
        %1310 = vmatprep.subr.mxu0 0.0
        %1311 = vmatpush1.msra.mxu0 0.0
        %1312 = vmatprep.subr.mxu0 0.0
        %1313 = vmatpush1.msra.mxu0 0.0
        %1314 = vmatprep.subr.mxu0 0.0
        %1315 = vmatpush1.msra.mxu0 0.0
        %1316 = vmatprep.subr.mxu0 0.0
        %1317 = vmatpush1.msra.mxu0 0.0
        %1318 = vmatprep.subr.mxu0 0.0
        %1319 = vmatpush1.msra.mxu0 0.0
        %1320 = vmatprep.subr.mxu0 0.0
        %1321 = vmatpush1.msra.mxu0 0.0
        %1322 = vmatprep.subr.mxu0 0.0
        %1323 = vmatpush1.msra.mxu0 0.0
        %1324 = vmatprep.subr.mxu0 0.0
        %1325 = vmatpush1.msra.mxu0 0.0
        %1326 = vmatprep.subr.mxu0 0.0
        %1327 = vmatpush1.msra.mxu0 0.0
        %1328 = vmatprep.subr.mxu0 0.0
        %1329 = vmatpush1.msra.mxu0 0.0
        %1330 = vmatprep.subr.mxu0 0.0
        %1331 = vmatpush1.msra.mxu0 0.0
        %1332 = vmatprep.subr.mxu0 0.0
        %1333 = vmatpush1.msra.mxu0 0.0
        %1334 = vmatprep.subr.mxu0 0.0
        %1335 = vmatpush1.msra.mxu0 0.0
        %1336 = vmatprep.subr.mxu0 0.0
        %1337 = vmatpush1.msra.mxu0 0.0
        %1338 = vmatprep.subr.mxu0 0.0
        %1339 = vmatpush1.msra.mxu0 0.0
        %1340 = vmatprep.subr.mxu0 0.0
        %1341 = vmatpush1.msra.mxu0 0.0
        %1342 = vmatprep.subr.mxu0 0.0
        %1343 = vmatpush1.msra.mxu0 0.0
        %1344 = vmatprep.subr.mxu0 0.0
        %1345 = vmatpush1.msra.mxu0 0.0
        %1346 = vmatprep.subr.mxu0 0.0
        %1347 = vmatpush1.msra.mxu0 0.0
        %1348 = vmatprep.mubr.f32.mxu0 0.0
        %1349 = vmatmul.mubr.f32.gmra.mrb[0].mxu0 %v1282
        %v1350 = vpop.f32.mrb[0].mxu0
        %v1351 = vadd.f32 %v1279, %v1350
        %v1352 = vpop.f32.mrb[0].mxu0
        %1353 = vdwg.mxu0
        %1354 = vst.msk [vmem:[%s360] sm:$0xff] %vm1280, %v1351
        %s1355 = sand.u32 %s185, 1
        %s1356 = scalar_lea.sflag [#allocation8], %s1355
        %s1357 = sand.u32 %s185, 1
        %s1358 = smul.addr %s1357, 8
        %s1359 = scalar_lea.vmem [#allocation15], %s1358
        // Predicated region
        $region69: #{tpu_custom_call.1} parent=43 // pred_check
          %p1360 = pneg %p195
        $region70: #{tpu_custom_call.1} parent=43 // pred_check_branch
          %1362 = sbr.rel (%p1360) target = $region72
        $region71: #{tpu_custom_call.1} parent=43 // pred_region
          %s1364 = ssub.s32 128, 128
          %1365 = vsyncadd %s1356, %s1364
          %s1366 = sadd.s32 %s32, %s31
          %s1367 = smul.addr %s1366, 128
          %s1368 = scalar_lea.hbm %s6, %s1367
          %s1370 = sshll.u32 %s1359, 4
          %s1371 = int_to_ptr.vmem [resolvable:$true] %s1370
          %1373 = dma.vmem_to_hbm [thread:$0]  %s1371, 128, %s1368, %s1356
        $region72: #{tpu_custom_call.1} parent=43 // pred_fallthru
          _
      $region44: #{tpu_custom_call.1} parent=5 // pred_fallthru
        _
      %p1374 = scmp.le.s32.totalorder 2, %s22
      // Predicated region
      $region73: #{tpu_custom_call.1} parent=5 // pred_check
        %p1375 = pneg %p1374
      $region74: #{tpu_custom_call.1} parent=5 // pred_check_branch
        %1377 = sbr.rel (%p1375) target = $region76
      $region75: #{tpu_custom_call.1} parent=5 // pred_region
        %s1378 = ssub.s32 %s22, 2
        // Predicated region
        $region77: #{tpu_custom_call.1} parent=75 // pred_check
          %p1379 = pneg %p201
        $region78: #{tpu_custom_call.1} parent=75 // pred_check_branch
          %1381 = sbr.rel (%p1379) target = $region80
        $region79: #{tpu_custom_call.1} parent=75 // pred_region
          %s1382 = sand.u32 %s186, 1
          %s1383 = scalar_lea.sflag [#allocation8], %s1382
          %s1384 = sand.u32 %s186, 1
          %s1385 = smul.addr %s1384, 8
          %s1386 = scalar_lea.vmem [#allocation15], %s1385
          %1387 = dma.done %s1383, 128
        $region80: #{tpu_custom_call.1} parent=75 // pred_fallthru
          _
      $region76: #{tpu_custom_call.1} parent=5 // pred_fallthru
        _
    $region6: #{tpu_custom_call.1} parent=1 // loop_footer
      %s26 = sadd.s32 1, %s22
    $region7: #{tpu_custom_call.1} parent=1 // loop_footer_branch
      %21 = sbr.rel target = $region3
    $region8: #{tpu_custom_call.1} parent=1 // loop_exit
      _
    %1388 = vsyncpa [#allocation7], 1
    %s1389 = scalar_lea.sflag [#allocation7], 1
    %1390 = vsyncpa %s1389, 1
    %1391 = vsyncpa [#allocation10], 1
    %s1392 = scalar_lea.sflag [#allocation10], 1
    %1393 = vsyncpa %s1392, 1
    %1394 = vsyncpa [#allocation13], 1
    %1395 = vsyncpa [#allocation8], 1
    %s1396 = scalar_lea.sflag [#allocation8], 1
    %1397 = vsyncpa %s1396, 1

</llo_original>
